<compile_context>
chip_gen: v7x
topology: tpu7x:2x2x1
jax: 0.10.0
libtpu: 0.0.40
codegen_flags: <defaults>
</compile_context>

<pallas_src>
import functools

import jax
import jax.numpy as jnp
from jax.experimental import pallas as pl
from jax.experimental.pallas import tpu as pltpu


def _lstm_predictor_kernel(x_ref,      # (B, T, I)  f32
                           wih0_ref,   # (I, 8H)    bf16  layer-0 input proj (layer-1 cols zero)
                           wrec_ref,   # (2H, 8H)   bf16  fused recurrent [[Whh0|Wih1],[0|Whh1]]
                           b_ref,      # (1, 8H)    f32   layer-0 bias / layer-1 bias, interleaved
                           wfc_ref,    # (2H, O)    bf16  [zeros ; W_fc.T]
                           bfc_ref,    # (1, O)     f32
                           out_ref,    # (B, O)     f32
                           *, batch, hidden, seq_len):
    B, H, T = batch, hidden, seq_len
    H2, H8 = 2 * H, 8 * H

    # Weight loads + bias broadcast hoisted once (broadcast_in_dim is not CSE'd).
    wih0 = wih0_ref[...]
    wrec = wrec_ref[...]
    bias = jnp.broadcast_to(b_ref[...], (B, H8))

    def cell(gates, cc):
        # packed gate layout: [ i0 i1 | f0 f1 | o0 o1 | g0 g1 ], each group 2H lanes;
        # layer-0 occupies the first H lanes of each group, layer-1 the next H.
        sg = jax.nn.sigmoid(gates)              # full-vreg EUP pass (g slots unused)
        gg = jnp.tanh(gates[:, 3 * H2:])        # candidate gate
        i_g = sg[:, :H2]
        f_g = sg[:, H2:2 * H2]
        o_g = sg[:, 2 * H2:3 * H2]
        cc_new = f_g * cc + i_g * gg
        hh_new = o_g * jnp.tanh(cc_new)
        return hh_new, cc_new

    def in_proj(t):
        # Layer-0 input projection for step t (static t); independent of hh,
        # so the scheduler can hide it under the recurrent-matmul latency.
        x_t = x_ref[:, t, :].astype(jnp.bfloat16)           # (B, I)
        return bias + jnp.dot(x_t, wih0, preferred_element_type=jnp.float32)

    # ---- stage 0: layer-0 step 0 only (recurrent lhs is all-zero -> skip the matmul) ----
    hh, cc = cell(in_proj(0), jnp.zeros((B, H2), jnp.float32))
    # The layer-1 half of stage 0 "processed" a non-existent step -1; reset it to zero.
    l0_mask = (jax.lax.broadcasted_iota(jnp.int32, (B, H2), 1) < H).astype(jnp.float32)
    hh = hh * l0_mask
    cc = cc * l0_mask

    # ---- stages 1..T: skewed recurrence, one fused matmul per stage ----
    # Stage s computes layer-0 gates for step s and layer-1 gates for step s-1
    # in a single (B,2H)@(2H,8H) matmul; state stays packed (no concat, no repack).
    for s in range(1, T + 1):
        add = in_proj(s) if s < T else bias      # stage T: no layer-0 step; l0 half is don't-care
        gates = add + jnp.dot(hh.astype(jnp.bfloat16), wrec,
                              preferred_element_type=jnp.float32)
        hh, cc = cell(gates, cc)

    # hh = [ <don't-care layer-0 half> | h1(T-1) ].  wfc has zero rows for the
    # layer-0 half, so the Linear reads h1 directly - no lane slice needed.
    out_ref[...] = (jnp.dot(hh.astype(jnp.bfloat16), wfc_ref[...],
                            preferred_element_type=jnp.float32) + bfc_ref[...])


def prepare_params(params, *, hidden_size):
    """One-time repack of PyTorch-layout weights into the fused kernel layout.

    Runs outside the per-call path so each forward call traces to just the
    Pallas call (no per-call transposes / concats / reorders).
    """
    (w_ih0, w_hh0, b_ih0, b_hh0,
     w_ih1, w_hh1, b_ih1, b_hh1,
     w_fc, b_fc) = params
    H = hidden_size
    I = w_ih0.shape[1]
    O = w_fc.shape[0]

    def reord(w):
        # (..., 4H) PyTorch gate order [i f g o] -> kernel order [i f o g]
        return jnp.concatenate([w[..., :2 * H], w[..., 3 * H:], w[..., 2 * H:3 * H]], axis=-1)

    def interleave(l0, l1):
        # (R,4H),(R,4H) -> (R,8H) grouped by gate type, layer-packed within each group
        R = l0.shape[0]
        return jnp.stack([l0.reshape(R, 4, H), l1.reshape(R, 4, H)], axis=2).reshape(R, 8 * H)

    zeros4h = lambda rows: jnp.zeros((rows, 4 * H), jnp.float32)

    wih0 = interleave(reord(w_ih0.T), zeros4h(I))                       # (I, 8H)
    wrec = jnp.concatenate([
        interleave(reord(w_hh0.T), reord(w_ih1.T)),                     # rows driven by h0_prev
        interleave(zeros4h(H), reord(w_hh1.T)),                         # rows driven by h1_prev
    ], axis=0)                                                          # (2H, 8H)
    b8 = interleave(reord((b_ih0 + b_hh0)[None, :]),
                    reord((b_ih1 + b_hh1)[None, :]))                    # (1, 8H)
    wfc = jnp.concatenate([jnp.zeros((H, O), jnp.float32), w_fc.T], axis=0)  # (2H, O)

    return (wih0.astype(jnp.bfloat16),
            wrec.astype(jnp.bfloat16),
            b8.astype(jnp.float32),
            wfc.astype(jnp.bfloat16),
            b_fc.reshape(1, -1).astype(jnp.float32))


@jax.jit
def lstm_predictor(x, packed):
    """x: (B, T, I) float32 (batch_first, as in the PyTorch module).
    packed: output of prepare_params.  Returns (B, output_size) float32."""
    wih0, wrec, b8, wfc, bfc = packed
    B, T, _ = x.shape
    H = wrec.shape[0] // 2
    O = wfc.shape[1]

    kernel = functools.partial(_lstm_predictor_kernel, batch=B, hidden=H, seq_len=T)
    return pl.pallas_call(
        kernel,
        out_shape=jax.ShapeDtypeStruct((B, O), jnp.float32),
        in_specs=[pl.BlockSpec(memory_space=pltpu.MemorySpace.VMEM)] * 6,
        out_specs=pl.BlockSpec(memory_space=pltpu.MemorySpace.VMEM),
    )(x, wih0, wrec, b8, wfc, bfc)


def make_params(key, input_size, hidden_size, output_size):
    """Deterministic init matching PyTorch shapes: W_ih (4H,in), W_hh (4H,H), b (4H,)."""
    H = hidden_size
    k = 1.0 / jnp.sqrt(jnp.float32(H))
    keys = jax.random.split(key, 10)
    u = lambda kk, shape: jax.random.uniform(kk, shape, jnp.float32, -k, k)
    w_ih0 = u(keys[0], (4 * H, input_size))
    w_hh0 = u(keys[1], (4 * H, H))
    b_ih0 = u(keys[2], (4 * H,))
    b_hh0 = u(keys[3], (4 * H,))
    w_ih1 = u(keys[4], (4 * H, H))
    w_hh1 = u(keys[5], (4 * H, H))
    b_ih1 = u(keys[6], (4 * H,))
    b_hh1 = u(keys[7], (4 * H,))
    w_fc = u(keys[8], (output_size, H))
    b_fc = u(keys[9], (output_size,))
    return (w_ih0, w_hh0, b_ih0, b_hh0,
            w_ih1, w_hh1, b_ih1, b_hh1,
            w_fc, b_fc)


def reference_forward(x, params, hidden_size):
    """Pure-JAX f32 reference replicating nn.LSTM (2 layers) + last step + fc, eval mode."""
    (w_ih0, w_hh0, b_ih0, b_hh0,
     w_ih1, w_hh1, b_ih1, b_hh1,
     w_fc, b_fc) = params
    H = hidden_size
    B, T, _ = x.shape

    def cell(x_t, h, c, w_ih, w_hh, b_ih, b_hh):
        g = x_t @ w_ih.T + b_ih + h @ w_hh.T + b_hh
        i = jax.nn.sigmoid(g[:, :H])
        f = jax.nn.sigmoid(g[:, H:2 * H])
        gg = jnp.tanh(g[:, 2 * H:3 * H])
        o = jax.nn.sigmoid(g[:, 3 * H:])
        c = f * c + i * gg
        h = o * jnp.tanh(c)
        return h, c

    h0 = c0 = h1 = c1 = jnp.zeros((B, H), jnp.float32)
    for t in range(T):
        h0, c0 = cell(x[:, t, :], h0, c0, w_ih0, w_hh0, b_ih0, b_hh0)
        h1, c1 = cell(h0, h1, c1, w_ih1, w_hh1, b_ih1, b_hh1)
    return h1 @ w_fc.T + b_fc


if __name__ == "__main__":
    B, T = 8, 8
    INPUT_SIZE, HIDDEN_SIZE, NUM_LAYERS, OUTPUT_SIZE = 16, 32, 2, 4  # num_layers=2 hardcoded in kernel

    key = jax.random.PRNGKey(0)
    kx, kp = jax.random.split(key)
    x = jax.random.normal(kx, (B, T, INPUT_SIZE), jnp.float32)
    params = make_params(kp, INPUT_SIZE, HIDDEN_SIZE, OUTPUT_SIZE)

    packed = prepare_params(params, hidden_size=HIDDEN_SIZE)       # one-time repack
    out = jax.block_until_ready(lstm_predictor(x, packed))

    ref = reference_forward(x, params, HIDDEN_SIZE)
    assert out.shape == (B, OUTPUT_SIZE)
    # bf16 MXU operands (f32 accumulation) vs the pure-f32 reference -> ~1e-3-level agreement;
    # a genuinely wrong kernel would be off by O(0.1-1), so this still catches real bugs.
    max_err = jnp.max(jnp.abs(out - ref))
    assert jnp.allclose(out, ref, atol=3e-2, rtol=3e-2), f"mismatch: max abs err {max_err}"

    print("KERNEL_OK")
</pallas_src>

<mosaic_0001>
module attributes {stable_mosaic.version = 11 : i64} {
  func.func @_lstm_predictor_kernel(%arg0: memref<8x8x16xf32, #tpu.memory_space<vmem>>, %arg1: memref<16x256xbf16, #tpu.memory_space<vmem>>, %arg2: memref<64x256xbf16, #tpu.memory_space<vmem>>, %arg3: memref<1x256xf32, #tpu.memory_space<vmem>>, %arg4: memref<64x4xbf16, #tpu.memory_space<vmem>>, %arg5: memref<1x4xf32, #tpu.memory_space<vmem>>, %arg6: memref<8x4xf32, #tpu.memory_space<vmem>>) attributes {dimension_semantics = [], scalar_prefetch = 0 : i64, scratch_operands = 0 : i64, tpu.core_type = #tpu.core_type<tc>} {
    %c0 = arith.constant 0 : index
    %c0_0 = arith.constant 0 : index
    %0 = vector.load %arg1[%c0, %c0_0] : memref<16x256xbf16, #tpu.memory_space<vmem>>, vector<16x256xbf16>
    %c0_1 = arith.constant 0 : index
    %c0_2 = arith.constant 0 : index
    %1 = vector.load %arg2[%c0_1, %c0_2] : memref<64x256xbf16, #tpu.memory_space<vmem>>, vector<64x256xbf16>
    %c0_3 = arith.constant 0 : index
    %c0_4 = arith.constant 0 : index
    %2 = vector.load %arg3[%c0_3, %c0_4] : memref<1x256xf32, #tpu.memory_space<vmem>>, vector<1x256xf32>
    %3 = vector.shape_cast %2 : vector<1x256xf32> to vector<1x256xf32>
    %4 = vector.broadcast %3 : vector<1x256xf32> to vector<8x256xf32>
    %c0_5 = arith.constant 0 : index
    %c0_6 = arith.constant 0 : index
    %c0_7 = arith.constant 0 : index
    %5 = vector.load %arg0[%c0_5, %c0_6, %c0_7] : memref<8x8x16xf32, #tpu.memory_space<vmem>>, vector<8x1x16xf32>
    %6 = vector.shape_cast %5 : vector<8x1x16xf32> to vector<8x16xf32>
    %7 = arith.truncf %6 : vector<8x16xf32> to vector<8x16xbf16>
    %cst = arith.constant dense<0.000000e+00> : vector<8x256xf32>
    %8 = tpu.matmul %7, %0, %cst {dimension_numbers = #tpu.dot_dimension_numbers<[1], [0], [0], [1], [0, 0, 1, 1], [], []>} : vector<8x16xbf16>, vector<16x256xbf16>, vector<8x256xf32> -> vector<8x256xf32>
    %9 = arith.addf %4, %8 : vector<8x256xf32>
    %cst_8 = arith.constant 0.000000e+00 : f32
    %10 = vector.broadcast %cst_8 : f32 to vector<8x64xf32>
    %11 = arith.negf %9 : vector<8x256xf32>
    %12 = math.exp %11 : vector<8x256xf32>
    %cst_9 = arith.constant 1.000000e+00 : f32
    %13 = vector.broadcast %cst_9 : f32 to vector<8x256xf32>
    %14 = arith.addf %13, %12 : vector<8x256xf32>
    %15 = arith.divf %13, %14 : vector<8x256xf32>
    %16 = vector.extract_strided_slice %9 {offsets = [0, 192], sizes = [8, 64], strides = [1, 1]} : vector<8x256xf32> to vector<8x64xf32>
    %17 = math.tanh %16 : vector<8x64xf32>
    %18 = vector.extract_strided_slice %15 {offsets = [0, 0], sizes = [8, 64], strides = [1, 1]} : vector<8x256xf32> to vector<8x64xf32>
    %19 = vector.extract_strided_slice %15 {offsets = [0, 64], sizes = [8, 64], strides = [1, 1]} : vector<8x256xf32> to vector<8x64xf32>
    %20 = vector.extract_strided_slice %15 {offsets = [0, 128], sizes = [8, 64], strides = [1, 1]} : vector<8x256xf32> to vector<8x64xf32>
    %21 = arith.mulf %19, %10 : vector<8x64xf32>
    %22 = arith.mulf %18, %17 : vector<8x64xf32>
    %23 = arith.addf %21, %22 : vector<8x64xf32>
    %24 = math.tanh %23 : vector<8x64xf32>
    %25 = arith.mulf %20, %24 : vector<8x64xf32>
    %26 = tpu.iota {dimensions = array<i32: 1>} : vector<8x64xi32>
    %c32_i32 = arith.constant 32 : i32
    %27 = vector.broadcast %c32_i32 : i32 to vector<8x64xi32>
    %28 = arith.cmpi slt, %26, %27 : vector<8x64xi32>
    %29 = arith.extui %28 : vector<8x64xi1> to vector<8x64xi32>
    %30 = arith.sitofp %29 : vector<8x64xi32> to vector<8x64xf32>
    %31 = arith.mulf %25, %30 : vector<8x64xf32>
    %32 = arith.mulf %23, %30 : vector<8x64xf32>
    %c0_10 = arith.constant 0 : index
    %c1 = arith.constant 1 : index
    %c0_11 = arith.constant 0 : index
    %33 = vector.load %arg0[%c0_10, %c1, %c0_11] : memref<8x8x16xf32, #tpu.memory_space<vmem>>, vector<8x1x16xf32>
    %34 = vector.shape_cast %33 : vector<8x1x16xf32> to vector<8x16xf32>
    %35 = arith.truncf %34 : vector<8x16xf32> to vector<8x16xbf16>
    %cst_12 = arith.constant dense<0.000000e+00> : vector<8x256xf32>
    %36 = tpu.matmul %35, %0, %cst_12 {dimension_numbers = #tpu.dot_dimension_numbers<[1], [0], [0], [1], [0, 0, 1, 1], [], []>} : vector<8x16xbf16>, vector<16x256xbf16>, vector<8x256xf32> -> vector<8x256xf32>
    %37 = arith.addf %4, %36 : vector<8x256xf32>
    %38 = arith.truncf %31 : vector<8x64xf32> to vector<8x64xbf16>
    %cst_13 = arith.constant dense<0.000000e+00> : vector<8x256xf32>
    %39 = tpu.matmul %38, %1, %cst_13 {dimension_numbers = #tpu.dot_dimension_numbers<[1], [0], [0], [1], [0, 0, 1, 1], [], []>} : vector<8x64xbf16>, vector<64x256xbf16>, vector<8x256xf32> -> vector<8x256xf32>
    %40 = arith.addf %37, %39 : vector<8x256xf32>
    %41 = arith.negf %40 : vector<8x256xf32>
    %42 = math.exp %41 : vector<8x256xf32>
    %cst_14 = arith.constant 1.000000e+00 : f32
    %43 = vector.broadcast %cst_14 : f32 to vector<8x256xf32>
    %44 = arith.addf %43, %42 : vector<8x256xf32>
    %45 = arith.divf %43, %44 : vector<8x256xf32>
    %46 = vector.extract_strided_slice %40 {offsets = [0, 192], sizes = [8, 64], strides = [1, 1]} : vector<8x256xf32> to vector<8x64xf32>
    %47 = math.tanh %46 : vector<8x64xf32>
    %48 = vector.extract_strided_slice %45 {offsets = [0, 0], sizes = [8, 64], strides = [1, 1]} : vector<8x256xf32> to vector<8x64xf32>
    %49 = vector.extract_strided_slice %45 {offsets = [0, 64], sizes = [8, 64], strides = [1, 1]} : vector<8x256xf32> to vector<8x64xf32>
    %50 = vector.extract_strided_slice %45 {offsets = [0, 128], sizes = [8, 64], strides = [1, 1]} : vector<8x256xf32> to vector<8x64xf32>
    %51 = arith.mulf %49, %32 : vector<8x64xf32>
    %52 = arith.mulf %48, %47 : vector<8x64xf32>
    %53 = arith.addf %51, %52 : vector<8x64xf32>
    %54 = math.tanh %53 : vector<8x64xf32>
    %55 = arith.mulf %50, %54 : vector<8x64xf32>
    %c0_15 = arith.constant 0 : index
    %c2 = arith.constant 2 : index
    %c0_16 = arith.constant 0 : index
    %56 = vector.load %arg0[%c0_15, %c2, %c0_16] : memref<8x8x16xf32, #tpu.memory_space<vmem>>, vector<8x1x16xf32>
    %57 = vector.shape_cast %56 : vector<8x1x16xf32> to vector<8x16xf32>
    %58 = arith.truncf %57 : vector<8x16xf32> to vector<8x16xbf16>
    %cst_17 = arith.constant dense<0.000000e+00> : vector<8x256xf32>
    %59 = tpu.matmul %58, %0, %cst_17 {dimension_numbers = #tpu.dot_dimension_numbers<[1], [0], [0], [1], [0, 0, 1, 1], [], []>} : vector<8x16xbf16>, vector<16x256xbf16>, vector<8x256xf32> -> vector<8x256xf32>
    %60 = arith.addf %4, %59 : vector<8x256xf32>
    %61 = arith.truncf %55 : vector<8x64xf32> to vector<8x64xbf16>
    %cst_18 = arith.constant dense<0.000000e+00> : vector<8x256xf32>
    %62 = tpu.matmul %61, %1, %cst_18 {dimension_numbers = #tpu.dot_dimension_numbers<[1], [0], [0], [1], [0, 0, 1, 1], [], []>} : vector<8x64xbf16>, vector<64x256xbf16>, vector<8x256xf32> -> vector<8x256xf32>
    %63 = arith.addf %60, %62 : vector<8x256xf32>
    %64 = arith.negf %63 : vector<8x256xf32>
    %65 = math.exp %64 : vector<8x256xf32>
    %cst_19 = arith.constant 1.000000e+00 : f32
    %66 = vector.broadcast %cst_19 : f32 to vector<8x256xf32>
    %67 = arith.addf %66, %65 : vector<8x256xf32>
    %68 = arith.divf %66, %67 : vector<8x256xf32>
    %69 = vector.extract_strided_slice %63 {offsets = [0, 192], sizes = [8, 64], strides = [1, 1]} : vector<8x256xf32> to vector<8x64xf32>
    %70 = math.tanh %69 : vector<8x64xf32>
    %71 = vector.extract_strided_slice %68 {offsets = [0, 0], sizes = [8, 64], strides = [1, 1]} : vector<8x256xf32> to vector<8x64xf32>
    %72 = vector.extract_strided_slice %68 {offsets = [0, 64], sizes = [8, 64], strides = [1, 1]} : vector<8x256xf32> to vector<8x64xf32>
    %73 = vector.extract_strided_slice %68 {offsets = [0, 128], sizes = [8, 64], strides = [1, 1]} : vector<8x256xf32> to vector<8x64xf32>
    %74 = arith.mulf %72, %53 : vector<8x64xf32>
    %75 = arith.mulf %71, %70 : vector<8x64xf32>
    %76 = arith.addf %74, %75 : vector<8x64xf32>
    %77 = math.tanh %76 : vector<8x64xf32>
    %78 = arith.mulf %73, %77 : vector<8x64xf32>
    %c0_20 = arith.constant 0 : index
    %c3 = arith.constant 3 : index
    %c0_21 = arith.constant 0 : index
    %79 = vector.load %arg0[%c0_20, %c3, %c0_21] : memref<8x8x16xf32, #tpu.memory_space<vmem>>, vector<8x1x16xf32>
    %80 = vector.shape_cast %79 : vector<8x1x16xf32> to vector<8x16xf32>
    %81 = arith.truncf %80 : vector<8x16xf32> to vector<8x16xbf16>
    %cst_22 = arith.constant dense<0.000000e+00> : vector<8x256xf32>
    %82 = tpu.matmul %81, %0, %cst_22 {dimension_numbers = #tpu.dot_dimension_numbers<[1], [0], [0], [1], [0, 0, 1, 1], [], []>} : vector<8x16xbf16>, vector<16x256xbf16>, vector<8x256xf32> -> vector<8x256xf32>
    %83 = arith.addf %4, %82 : vector<8x256xf32>
    %84 = arith.truncf %78 : vector<8x64xf32> to vector<8x64xbf16>
    %cst_23 = arith.constant dense<0.000000e+00> : vector<8x256xf32>
    %85 = tpu.matmul %84, %1, %cst_23 {dimension_numbers = #tpu.dot_dimension_numbers<[1], [0], [0], [1], [0, 0, 1, 1], [], []>} : vector<8x64xbf16>, vector<64x256xbf16>, vector<8x256xf32> -> vector<8x256xf32>
    %86 = arith.addf %83, %85 : vector<8x256xf32>
    %87 = arith.negf %86 : vector<8x256xf32>
    %88 = math.exp %87 : vector<8x256xf32>
    %cst_24 = arith.constant 1.000000e+00 : f32
    %89 = vector.broadcast %cst_24 : f32 to vector<8x256xf32>
    %90 = arith.addf %89, %88 : vector<8x256xf32>
    %91 = arith.divf %89, %90 : vector<8x256xf32>
    %92 = vector.extract_strided_slice %86 {offsets = [0, 192], sizes = [8, 64], strides = [1, 1]} : vector<8x256xf32> to vector<8x64xf32>
    %93 = math.tanh %92 : vector<8x64xf32>
    %94 = vector.extract_strided_slice %91 {offsets = [0, 0], sizes = [8, 64], strides = [1, 1]} : vector<8x256xf32> to vector<8x64xf32>
    %95 = vector.extract_strided_slice %91 {offsets = [0, 64], sizes = [8, 64], strides = [1, 1]} : vector<8x256xf32> to vector<8x64xf32>
    %96 = vector.extract_strided_slice %91 {offsets = [0, 128], sizes = [8, 64], strides = [1, 1]} : vector<8x256xf32> to vector<8x64xf32>
    %97 = arith.mulf %95, %76 : vector<8x64xf32>
    %98 = arith.mulf %94, %93 : vector<8x64xf32>
    %99 = arith.addf %97, %98 : vector<8x64xf32>
    %100 = math.tanh %99 : vector<8x64xf32>
    %101 = arith.mulf %96, %100 : vector<8x64xf32>
    %c0_25 = arith.constant 0 : index
    %c4 = arith.constant 4 : index
    %c0_26 = arith.constant 0 : index
    %102 = vector.load %arg0[%c0_25, %c4, %c0_26] : memref<8x8x16xf32, #tpu.memory_space<vmem>>, vector<8x1x16xf32>
    %103 = vector.shape_cast %102 : vector<8x1x16xf32> to vector<8x16xf32>
    %104 = arith.truncf %103 : vector<8x16xf32> to vector<8x16xbf16>
    %cst_27 = arith.constant dense<0.000000e+00> : vector<8x256xf32>
    %105 = tpu.matmul %104, %0, %cst_27 {dimension_numbers = #tpu.dot_dimension_numbers<[1], [0], [0], [1], [0, 0, 1, 1], [], []>} : vector<8x16xbf16>, vector<16x256xbf16>, vector<8x256xf32> -> vector<8x256xf32>
    %106 = arith.addf %4, %105 : vector<8x256xf32>
    %107 = arith.truncf %101 : vector<8x64xf32> to vector<8x64xbf16>
    %cst_28 = arith.constant dense<0.000000e+00> : vector<8x256xf32>
    %108 = tpu.matmul %107, %1, %cst_28 {dimension_numbers = #tpu.dot_dimension_numbers<[1], [0], [0], [1], [0, 0, 1, 1], [], []>} : vector<8x64xbf16>, vector<64x256xbf16>, vector<8x256xf32> -> vector<8x256xf32>
    %109 = arith.addf %106, %108 : vector<8x256xf32>
    %110 = arith.negf %109 : vector<8x256xf32>
    %111 = math.exp %110 : vector<8x256xf32>
    %cst_29 = arith.constant 1.000000e+00 : f32
    %112 = vector.broadcast %cst_29 : f32 to vector<8x256xf32>
    %113 = arith.addf %112, %111 : vector<8x256xf32>
    %114 = arith.divf %112, %113 : vector<8x256xf32>
    %115 = vector.extract_strided_slice %109 {offsets = [0, 192], sizes = [8, 64], strides = [1, 1]} : vector<8x256xf32> to vector<8x64xf32>
    %116 = math.tanh %115 : vector<8x64xf32>
    %117 = vector.extract_strided_slice %114 {offsets = [0, 0], sizes = [8, 64], strides = [1, 1]} : vector<8x256xf32> to vector<8x64xf32>
    %118 = vector.extract_strided_slice %114 {offsets = [0, 64], sizes = [8, 64], strides = [1, 1]} : vector<8x256xf32> to vector<8x64xf32>
    %119 = vector.extract_strided_slice %114 {offsets = [0, 128], sizes = [8, 64], strides = [1, 1]} : vector<8x256xf32> to vector<8x64xf32>
    %120 = arith.mulf %118, %99 : vector<8x64xf32>
    %121 = arith.mulf %117, %116 : vector<8x64xf32>
    %122 = arith.addf %120, %121 : vector<8x64xf32>
    %123 = math.tanh %122 : vector<8x64xf32>
    %124 = arith.mulf %119, %123 : vector<8x64xf32>
    %c0_30 = arith.constant 0 : index
    %c5 = arith.constant 5 : index
    %c0_31 = arith.constant 0 : index
    %125 = vector.load %arg0[%c0_30, %c5, %c0_31] : memref<8x8x16xf32, #tpu.memory_space<vmem>>, vector<8x1x16xf32>
    %126 = vector.shape_cast %125 : vector<8x1x16xf32> to vector<8x16xf32>
    %127 = arith.truncf %126 : vector<8x16xf32> to vector<8x16xbf16>
    %cst_32 = arith.constant dense<0.000000e+00> : vector<8x256xf32>
    %128 = tpu.matmul %127, %0, %cst_32 {dimension_numbers = #tpu.dot_dimension_numbers<[1], [0], [0], [1], [0, 0, 1, 1], [], []>} : vector<8x16xbf16>, vector<16x256xbf16>, vector<8x256xf32> -> vector<8x256xf32>
    %129 = arith.addf %4, %128 : vector<8x256xf32>
    %130 = arith.truncf %124 : vector<8x64xf32> to vector<8x64xbf16>
    %cst_33 = arith.constant dense<0.000000e+00> : vector<8x256xf32>
    %131 = tpu.matmul %130, %1, %cst_33 {dimension_numbers = #tpu.dot_dimension_numbers<[1], [0], [0], [1], [0, 0, 1, 1], [], []>} : vector<8x64xbf16>, vector<64x256xbf16>, vector<8x256xf32> -> vector<8x256xf32>
    %132 = arith.addf %129, %131 : vector<8x256xf32>
    %133 = arith.negf %132 : vector<8x256xf32>
    %134 = math.exp %133 : vector<8x256xf32>
    %cst_34 = arith.constant 1.000000e+00 : f32
    %135 = vector.broadcast %cst_34 : f32 to vector<8x256xf32>
    %136 = arith.addf %135, %134 : vector<8x256xf32>
    %137 = arith.divf %135, %136 : vector<8x256xf32>
    %138 = vector.extract_strided_slice %132 {offsets = [0, 192], sizes = [8, 64], strides = [1, 1]} : vector<8x256xf32> to vector<8x64xf32>
    %139 = math.tanh %138 : vector<8x64xf32>
    %140 = vector.extract_strided_slice %137 {offsets = [0, 0], sizes = [8, 64], strides = [1, 1]} : vector<8x256xf32> to vector<8x64xf32>
    %141 = vector.extract_strided_slice %137 {offsets = [0, 64], sizes = [8, 64], strides = [1, 1]} : vector<8x256xf32> to vector<8x64xf32>
    %142 = vector.extract_strided_slice %137 {offsets = [0, 128], sizes = [8, 64], strides = [1, 1]} : vector<8x256xf32> to vector<8x64xf32>
    %143 = arith.mulf %141, %122 : vector<8x64xf32>
    %144 = arith.mulf %140, %139 : vector<8x64xf32>
    %145 = arith.addf %143, %144 : vector<8x64xf32>
    %146 = math.tanh %145 : vector<8x64xf32>
    %147 = arith.mulf %142, %146 : vector<8x64xf32>
    %c0_35 = arith.constant 0 : index
    %c6 = arith.constant 6 : index
    %c0_36 = arith.constant 0 : index
    %148 = vector.load %arg0[%c0_35, %c6, %c0_36] : memref<8x8x16xf32, #tpu.memory_space<vmem>>, vector<8x1x16xf32>
    %149 = vector.shape_cast %148 : vector<8x1x16xf32> to vector<8x16xf32>
    %150 = arith.truncf %149 : vector<8x16xf32> to vector<8x16xbf16>
    %cst_37 = arith.constant dense<0.000000e+00> : vector<8x256xf32>
    %151 = tpu.matmul %150, %0, %cst_37 {dimension_numbers = #tpu.dot_dimension_numbers<[1], [0], [0], [1], [0, 0, 1, 1], [], []>} : vector<8x16xbf16>, vector<16x256xbf16>, vector<8x256xf32> -> vector<8x256xf32>
    %152 = arith.addf %4, %151 : vector<8x256xf32>
    %153 = arith.truncf %147 : vector<8x64xf32> to vector<8x64xbf16>
    %cst_38 = arith.constant dense<0.000000e+00> : vector<8x256xf32>
    %154 = tpu.matmul %153, %1, %cst_38 {dimension_numbers = #tpu.dot_dimension_numbers<[1], [0], [0], [1], [0, 0, 1, 1], [], []>} : vector<8x64xbf16>, vector<64x256xbf16>, vector<8x256xf32> -> vector<8x256xf32>
    %155 = arith.addf %152, %154 : vector<8x256xf32>
    %156 = arith.negf %155 : vector<8x256xf32>
    %157 = math.exp %156 : vector<8x256xf32>
    %cst_39 = arith.constant 1.000000e+00 : f32
    %158 = vector.broadcast %cst_39 : f32 to vector<8x256xf32>
    %159 = arith.addf %158, %157 : vector<8x256xf32>
    %160 = arith.divf %158, %159 : vector<8x256xf32>
    %161 = vector.extract_strided_slice %155 {offsets = [0, 192], sizes = [8, 64], strides = [1, 1]} : vector<8x256xf32> to vector<8x64xf32>
    %162 = math.tanh %161 : vector<8x64xf32>
    %163 = vector.extract_strided_slice %160 {offsets = [0, 0], sizes = [8, 64], strides = [1, 1]} : vector<8x256xf32> to vector<8x64xf32>
    %164 = vector.extract_strided_slice %160 {offsets = [0, 64], sizes = [8, 64], strides = [1, 1]} : vector<8x256xf32> to vector<8x64xf32>
    %165 = vector.extract_strided_slice %160 {offsets = [0, 128], sizes = [8, 64], strides = [1, 1]} : vector<8x256xf32> to vector<8x64xf32>
    %166 = arith.mulf %164, %145 : vector<8x64xf32>
    %167 = arith.mulf %163, %162 : vector<8x64xf32>
    %168 = arith.addf %166, %167 : vector<8x64xf32>
    %169 = math.tanh %168 : vector<8x64xf32>
    %170 = arith.mulf %165, %169 : vector<8x64xf32>
    %c0_40 = arith.constant 0 : index
    %c7 = arith.constant 7 : index
    %c0_41 = arith.constant 0 : index
    %171 = vector.load %arg0[%c0_40, %c7, %c0_41] : memref<8x8x16xf32, #tpu.memory_space<vmem>>, vector<8x1x16xf32>
    %172 = vector.shape_cast %171 : vector<8x1x16xf32> to vector<8x16xf32>
    %173 = arith.truncf %172 : vector<8x16xf32> to vector<8x16xbf16>
    %cst_42 = arith.constant dense<0.000000e+00> : vector<8x256xf32>
    %174 = tpu.matmul %173, %0, %cst_42 {dimension_numbers = #tpu.dot_dimension_numbers<[1], [0], [0], [1], [0, 0, 1, 1], [], []>} : vector<8x16xbf16>, vector<16x256xbf16>, vector<8x256xf32> -> vector<8x256xf32>
    %175 = arith.addf %4, %174 : vector<8x256xf32>
    %176 = arith.truncf %170 : vector<8x64xf32> to vector<8x64xbf16>
    %cst_43 = arith.constant dense<0.000000e+00> : vector<8x256xf32>
    %177 = tpu.matmul %176, %1, %cst_43 {dimension_numbers = #tpu.dot_dimension_numbers<[1], [0], [0], [1], [0, 0, 1, 1], [], []>} : vector<8x64xbf16>, vector<64x256xbf16>, vector<8x256xf32> -> vector<8x256xf32>
    %178 = arith.addf %175, %177 : vector<8x256xf32>
    %179 = arith.negf %178 : vector<8x256xf32>
    %180 = math.exp %179 : vector<8x256xf32>
    %cst_44 = arith.constant 1.000000e+00 : f32
    %181 = vector.broadcast %cst_44 : f32 to vector<8x256xf32>
    %182 = arith.addf %181, %180 : vector<8x256xf32>
    %183 = arith.divf %181, %182 : vector<8x256xf32>
    %184 = vector.extract_strided_slice %178 {offsets = [0, 192], sizes = [8, 64], strides = [1, 1]} : vector<8x256xf32> to vector<8x64xf32>
    %185 = math.tanh %184 : vector<8x64xf32>
    %186 = vector.extract_strided_slice %183 {offsets = [0, 0], sizes = [8, 64], strides = [1, 1]} : vector<8x256xf32> to vector<8x64xf32>
    %187 = vector.extract_strided_slice %183 {offsets = [0, 64], sizes = [8, 64], strides = [1, 1]} : vector<8x256xf32> to vector<8x64xf32>
    %188 = vector.extract_strided_slice %183 {offsets = [0, 128], sizes = [8, 64], strides = [1, 1]} : vector<8x256xf32> to vector<8x64xf32>
    %189 = arith.mulf %187, %168 : vector<8x64xf32>
    %190 = arith.mulf %186, %185 : vector<8x64xf32>
    %191 = arith.addf %189, %190 : vector<8x64xf32>
    %192 = math.tanh %191 : vector<8x64xf32>
    %193 = arith.mulf %188, %192 : vector<8x64xf32>
    %194 = arith.truncf %193 : vector<8x64xf32> to vector<8x64xbf16>
    %cst_45 = arith.constant dense<0.000000e+00> : vector<8x256xf32>
    %195 = tpu.matmul %194, %1, %cst_45 {dimension_numbers = #tpu.dot_dimension_numbers<[1], [0], [0], [1], [0, 0, 1, 1], [], []>} : vector<8x64xbf16>, vector<64x256xbf16>, vector<8x256xf32> -> vector<8x256xf32>
    %196 = arith.addf %4, %195 : vector<8x256xf32>
    %197 = arith.negf %196 : vector<8x256xf32>
    %198 = math.exp %197 : vector<8x256xf32>
    %cst_46 = arith.constant 1.000000e+00 : f32
    %199 = vector.broadcast %cst_46 : f32 to vector<8x256xf32>
    %200 = arith.addf %199, %198 : vector<8x256xf32>
    %201 = arith.divf %199, %200 : vector<8x256xf32>
    %202 = vector.extract_strided_slice %196 {offsets = [0, 192], sizes = [8, 64], strides = [1, 1]} : vector<8x256xf32> to vector<8x64xf32>
    %203 = math.tanh %202 : vector<8x64xf32>
    %204 = vector.extract_strided_slice %201 {offsets = [0, 0], sizes = [8, 64], strides = [1, 1]} : vector<8x256xf32> to vector<8x64xf32>
    %205 = vector.extract_strided_slice %201 {offsets = [0, 64], sizes = [8, 64], strides = [1, 1]} : vector<8x256xf32> to vector<8x64xf32>
    %206 = vector.extract_strided_slice %201 {offsets = [0, 128], sizes = [8, 64], strides = [1, 1]} : vector<8x256xf32> to vector<8x64xf32>
    %207 = arith.mulf %205, %191 : vector<8x64xf32>
    %208 = arith.mulf %204, %203 : vector<8x64xf32>
    %209 = arith.addf %207, %208 : vector<8x64xf32>
    %210 = math.tanh %209 : vector<8x64xf32>
    %211 = arith.mulf %206, %210 : vector<8x64xf32>
    %212 = arith.truncf %211 : vector<8x64xf32> to vector<8x64xbf16>
    %c0_47 = arith.constant 0 : index
    %c0_48 = arith.constant 0 : index
    %213 = vector.load %arg4[%c0_47, %c0_48] : memref<64x4xbf16, #tpu.memory_space<vmem>>, vector<64x4xbf16>
    %cst_49 = arith.constant dense<0.000000e+00> : vector<8x4xf32>
    %214 = tpu.matmul %212, %213, %cst_49 {dimension_numbers = #tpu.dot_dimension_numbers<[1], [0], [0], [1], [0, 0, 1, 1], [], []>} : vector<8x64xbf16>, vector<64x4xbf16>, vector<8x4xf32> -> vector<8x4xf32>
    %c0_50 = arith.constant 0 : index
    %c0_51 = arith.constant 0 : index
    %215 = vector.load %arg5[%c0_50, %c0_51] : memref<1x4xf32, #tpu.memory_space<vmem>>, vector<1x4xf32>
    %216 = vector.broadcast %215 : vector<1x4xf32> to vector<8x4xf32>
    %217 = arith.addf %214, %216 : vector<8x4xf32>
    %c0_52 = arith.constant 0 : index
    %c0_53 = arith.constant 0 : index
    %218 = vector.load %arg6[%c0_52, %c0_53] : memref<8x4xf32, #tpu.memory_space<vmem>>, vector<8x4xf32>
    tpu.vector_store %arg6[%c0_52, %c0_53], %217 {strides = array<i32>} : memref<8x4xf32, #tpu.memory_space<vmem>>, vector<8x4xf32>,
    return
  }
}

</mosaic_0001>

<llo_original>
// kernel: lstm_predictor.1
$region0: #{lstm_predictor.1}
  #allocation0 [shape = 'u32[]', space=smem, size = 0x4, offset = 0x4, fixed_abs, tag = 'smem constant byte address 0x4 - core index']
  #allocation1 [shape = 'u32[144,128]{1,0:T(1,128)}', space=vmem, size = 0x12000, scoped, tag = 'internal scratch']
  %s0 = inlined_call_operand.hbm [shape: f32[8,8,16], index: 0, kind: input, shape index: {}]
  %s1 = inlined_call_operand.vmem [shape: bf16[16,256], index: 1, kind: input, shape index: {}]
  %s2 = inlined_call_operand.hbm [shape: bf16[64,256], index: 2, kind: input, shape index: {}]
  %s3 = inlined_call_operand.vmem [shape: f32[1,256], index: 3, kind: input, shape index: {}]
  %s4 = inlined_call_operand.vmem [shape: bf16[64,4], index: 4, kind: input, shape index: {}]
  %s5 = inlined_call_operand.vmem [shape: f32[1,4], index: 5, kind: input, shape index: {}]
  %s6 = inlined_call_operand.vmem [shape: f32[8,4], index: 6, kind: output, shape index: {}]
  %s7 = sld [smem:[#allocation0]]
  $region42: #{lstm_predictor.1} parent=0
    _
  %s9 = ssub.s32 1, %s7
  %s10 = scalar_select 0, %s9, %s7
  $region1: #{lstm_predictor.1} parent=0
    #allocation2 [shape = 'u8[32768]{0}', space=vmem, size = 0x8000, scoped, tag = 'input window, operand 0, single buffered']
    #allocation3 [shape = 's32[1]{0}', space=sflag, size = 0x4, scoped, tag = 'scoped memory for lstm_predictor.1']
    #allocation4 [shape = 'u8[32768]{0}', space=vmem, size = 0x8000, scoped, tag = 'input window, operand 2, single buffered']
    #allocation5 [shape = 's32[1]{0}', space=sflag, size = 0x4, scoped, tag = 'scoped memory for lstm_predictor.1']
    %11 = vsyncpa [#allocation3], 0
    %12 = vsyncpa [#allocation5], 0
    // Predicated region
    $region2: #{lstm_predictor.1} parent=1 // pred_check
      _
    $region3: #{lstm_predictor.1} parent=1 // pred_check_branch
      %14 = sbr.rel (0) target = $region5
    $region4: #{lstm_predictor.1} parent=1 // pred_region
      %s16 = ssub.s32 1024, 1024
      %17 = vsyncadd [#allocation3], %s16
      %s18 = sshll.u32 [#allocation2], 4
      %s19 = int_to_ptr.vmem [resolvable:$true] %s18
      %24 = dma.hbm_to_vmem [thread:$0]  %s0, 1024, %s19, [#allocation3], 128, 128, 8
    $region5: #{lstm_predictor.1} parent=1 // pred_fallthru
      _
    // Predicated region
    $region6: #{lstm_predictor.1} parent=1 // pred_check
      _
    $region7: #{lstm_predictor.1} parent=1 // pred_check_branch
      %26 = sbr.rel (0) target = $region9
    $region8: #{lstm_predictor.1} parent=1 // pred_region
      _
    $region9: #{lstm_predictor.1} parent=1 // pred_fallthru
      _
    // Predicated region
    $region10: #{lstm_predictor.1} parent=1 // pred_check
      _
    $region11: #{lstm_predictor.1} parent=1 // pred_check_branch
      %28 = sbr.rel (0) target = $region13
    $region12: #{lstm_predictor.1} parent=1 // pred_region
      %s30 = ssub.s32 1024, 1024
      %31 = vsyncadd [#allocation5], %s30
      %s32 = sshll.u32 [#allocation4], 4
      %s33 = int_to_ptr.vmem [resolvable:$true] %s32
      %38 = dma.hbm_to_vmem [thread:$0]  %s2, 1024, %s33, [#allocation5], 128, 128, 8
    $region13: #{lstm_predictor.1} parent=1 // pred_fallthru
      _
    // Predicated region
    $region14: #{lstm_predictor.1} parent=1 // pred_check
      _
    $region15: #{lstm_predictor.1} parent=1 // pred_check_branch
      %40 = sbr.rel (0) target = $region17
    $region16: #{lstm_predictor.1} parent=1 // pred_region
      _
    $region17: #{lstm_predictor.1} parent=1 // pred_fallthru
      _
    // Predicated region
    $region18: #{lstm_predictor.1} parent=1 // pred_check
      _
    $region19: #{lstm_predictor.1} parent=1 // pred_check_branch
      %42 = sbr.rel (0) target = $region21
    $region20: #{lstm_predictor.1} parent=1 // pred_region
      _
    $region21: #{lstm_predictor.1} parent=1 // pred_fallthru
      _
    // Predicated region
    $region22: #{lstm_predictor.1} parent=1 // pred_check
      _
    $region23: #{lstm_predictor.1} parent=1 // pred_check_branch
      %44 = sbr.rel (0) target = $region25
    $region24: #{lstm_predictor.1} parent=1 // pred_region
      _
    $region25: #{lstm_predictor.1} parent=1 // pred_fallthru
      _
    // Predicated region
    $region26: #{lstm_predictor.1} parent=1 // pred_check
      _
    $region27: #{lstm_predictor.1} parent=1 // pred_check_branch
      %46 = sbr.rel (0) target = $region29
    $region28: #{lstm_predictor.1} parent=1 // pred_region
      %47 = dma.done [#allocation3], 1024
    $region29: #{lstm_predictor.1} parent=1 // pred_fallthru
      _
    // Predicated region
    $region30: #{lstm_predictor.1} parent=1 // pred_check
      _
    $region31: #{lstm_predictor.1} parent=1 // pred_check_branch
      %49 = sbr.rel (0) target = $region33
    $region32: #{lstm_predictor.1} parent=1 // pred_region
      %50 = dma.done [#allocation5], 1024
    $region33: #{lstm_predictor.1} parent=1 // pred_fallthru
      _
    %v52 = vld [vmem:[%s1] sm:$0xff]
    %v53 = vld [vmem:[%s1 + $0x8] sm:$0xff]
    %v54 = vld [vmem:[#allocation4] sm:$0xff]
    %v55 = vld [vmem:[#allocation4 + $0x8] sm:$0xff]
    %v56 = vld [vmem:[#allocation4 + $0x10] sm:$0xff]
    %v57 = vld [vmem:[#allocation4 + $0x18] sm:$0xff]
    %v58 = vld [vmem:[#allocation4 + $0x20] sm:$0xff]
    %v59 = vld [vmem:[#allocation4 + $0x28] sm:$0xff]
    %v60 = vld [vmem:[#allocation4 + $0x30] sm:$0xff]
    %v61 = vld [vmem:[#allocation4 + $0x38] sm:$0xff]
    %v62 = vld [vmem:[%s3] sm:$0x3]
    %v64 = vlaneseq
    %v65 = vshrl.u32 %v64, 7
    %v66 = vsub.s32 0, %v65
    %v67 = vrot.slane %v62, %v66
    %v68 = vlaneseq
    %v69 = vshrl.u32 %v68, 7
    %v70 = vsub.s32 1, %v69
    %v71 = vrot.slane %v62, %v70
    %v74 = vld [vmem:[#allocation2] sm:$0x1]
    %v75 = vld [vmem:[#allocation2 + $0x8] sm:$0x1]
    %v76 = vld [vmem:[#allocation2 + $0x10] sm:$0x1]
    %v77 = vld [vmem:[#allocation2 + $0x18] sm:$0x1]
    %v78 = vld [vmem:[#allocation2 + $0x20] sm:$0x1]
    %v79 = vld [vmem:[#allocation2 + $0x28] sm:$0x1]
    %v80 = vld [vmem:[#allocation2 + $0x30] sm:$0x1]
    %v81 = vld [vmem:[#allocation2 + $0x38] sm:$0x1]
    %v82 = vpack.c.bf16 %v74, %v74
    %v83 = vpack.c.bf16 %v75, %v75
    %v84 = vpack.c.bf16 %v76, %v76
    %v85 = vpack.c.bf16 %v77, %v77
    %v86 = vpack.c.bf16 %v78, %v78
    %v87 = vpack.c.bf16 %v79, %v79
    %v88 = vpack.c.bf16 %v80, %v80
    %v89 = vpack.c.bf16 %v81, %v81
    %v98 = vunpack.c.l.b16 %v82
    %v99 = vunpack.c.l.b16 %v83
    %v100 = vunpack.c.l.b16 %v84
    %v101 = vunpack.c.l.b16 %v85
    %v102 = vunpack.c.l.b16 %v86
    %v103 = vunpack.c.l.b16 %v87
    %v104 = vunpack.c.l.b16 %v88
    %v105 = vunpack.c.l.b16 %v89
    %v106 = vrot.slane %v99, 7
    %vm107 = vcmask 1041409
    %v108 = vsel %vm107, %v106, %v98
    %v109 = vrot.slane %v100, 6
    %vm110 = vcmask 1042434
    %v111 = vsel %vm110, %v109, %v108
    %v112 = vrot.slane %v101, 5
    %vm113 = vcmask 1043459
    %v114 = vsel %vm113, %v112, %v111
    %v115 = vrot.slane %v102, 4
    %vm116 = vcmask 1044484
    %v117 = vsel %vm116, %v115, %v114
    %v118 = vrot.slane %v103, 3
    %vm119 = vcmask 1045509
    %v120 = vsel %vm119, %v118, %v117
    %v121 = vrot.slane %v104, 2
    %vm122 = vcmask 1046534
    %v123 = vsel %vm122, %v121, %v120
    %v124 = vrot.slane %v105, 1
    %vm125 = vcmask 1047559
    %v126 = vsel %vm125, %v124, %v123
    %v127 = vpack.c.b16 %v126, %v126
    %v130 = vunpack.c.l.b16 %v52
    %v131 = vunpack.c.h.b16 %v52
    %v132 = vunpack.c.l.b16 %v53
    %v133 = vunpack.c.h.b16 %v53
    %v134 = vpack.c.b16 %v132, %v130
    %v135 = vpack.c.b16 %v133, %v131
    %vm138 = vcmask 130048
    %v140 = vsel %vm138, %v127, 0
    %142 = vmatprep.subr.bf16.mxu0 %v135
    %143 = vmatpush1.bf16.msra.mxu0 %v134
    %144 = vmatprep.subr.bf16.mxu0 0
    %145 = vmatpush1.bf16.msra.mxu0 0
    %146 = vmatprep.subr.bf16.mxu0 0
    %147 = vmatpush1.bf16.msra.mxu0 0
    %148 = vmatprep.subr.bf16.mxu0 0
    %149 = vmatpush1.bf16.msra.mxu0 0
    %150 = vmatprep.subr.bf16.mxu0 0
    %151 = vmatpush1.bf16.msra.mxu0 0
    %152 = vmatprep.subr.bf16.mxu0 0
    %153 = vmatpush1.bf16.msra.mxu0 0
    %154 = vmatprep.subr.bf16.mxu0 0
    %155 = vmatpush1.bf16.msra.mxu0 0
    %156 = vmatprep.subr.bf16.mxu0 0
    %157 = vmatpush1.bf16.msra.mxu0 0
    %158 = vmatprep.subr.bf16.mxu0 0
    %159 = vmatpush1.bf16.msra.mxu0 0
    %160 = vmatprep.subr.bf16.mxu0 0
    %161 = vmatpush1.bf16.msra.mxu0 0
    %162 = vmatprep.subr.bf16.mxu0 0
    %163 = vmatpush1.bf16.msra.mxu0 0
    %164 = vmatprep.subr.bf16.mxu0 0
    %165 = vmatpush1.bf16.msra.mxu0 0
    %166 = vmatprep.subr.bf16.mxu0 0
    %167 = vmatpush1.bf16.msra.mxu0 0
    %168 = vmatprep.subr.bf16.mxu0 0
    %169 = vmatpush1.bf16.msra.mxu0 0
    %170 = vmatprep.subr.bf16.mxu0 0
    %171 = vmatpush1.bf16.msra.mxu0 0
    %172 = vmatprep.subr.bf16.mxu0 0
    %173 = vmatpush1.bf16.msra.mxu0 0
    %174 = vmatprep.mubr.bf16.mxu0 0
    %175 = vmatmul.mubr.bf16.gmra.mrb[0].mxu0 %v140
    %v176 = vpop.f32.mrb[0].mxu0
    %v177 = vadd.f32 0.0, %v176
    %v178 = vpop.f32.mrb[0].mxu0
    %v179 = vadd.f32 0.0, %v178
    %v180 = vpop.f32.mrb[0].mxu0
    %v181 = vpop.f32.mrb[0].mxu0
    %182 = vdwg.mxu0
    %v183 = vadd.f32 %v67, %v177
    %v184 = vadd.f32 %v71, %v179
    %v185 = vxor.u32 %v183, 2147483648
    %v186 = vxor.u32 %v184, 2147483648
    %v187 = vmul.f32 %v185, 1.442695
    %v188 = vpow.pop %v187
    %v189 = vmul.f32 %v186, 1.442695
    %v190 = vpow.pop %v189
    %v191 = vadd.f32 %v188, 1.0
    %v192 = vadd.f32 %v190, 1.0
    %v193 = vrcp.pop %v191
    %v194 = vmul.f32 1.0, %v193
    %v195 = vrcp.pop %v192
    %v196 = vmul.f32 1.0, %v195
    %v197 = vtanh.pop %v184
    %v198 = vmul.f32 %v194, 0.0
    %200 = vrot.lane.b32.xlu0 %v197, 64
    %v201 = vpop.permute.xlu0 %200
    %v203 = vmul.f32 %v194, %v201
    %205 = vrot.lane.b32.xlu0 %v203, 64
    %v206 = vpop.permute.xlu0 %205
    %v208 = vadd.f32 %v198, %v206
    %v209 = vtanh.pop %v208
    %211 = vrot.lane.b32.xlu0 %v209, 64
    %v212 = vpop.permute.xlu0 %211
    %v214 = vmul.f32 %v196, %v212
    %v215 = vlaneseq
    %v216 = vand.u32 %v215, 127
    %vm217 = vcmp.lt.s32.totalorder %v216, 32
    %v218 = vsel %vm217, 1, 0
    %v219 = vcvt.s32.f32 %v218
    %v220 = vmul.f32 %v214, %v219
    %222 = vrot.lane.b32.xlu0 %v219, 64
    %v223 = vpop.permute.xlu0 %222
    %v225 = vmul.f32 %v208, %v223
    %v226 = vld [vmem:[#allocation2 + $0x1] sm:$0x1]
    %v227 = vld [vmem:[#allocation2 + $0x9] sm:$0x1]
    %v228 = vld [vmem:[#allocation2 + $0x11] sm:$0x1]
    %v229 = vld [vmem:[#allocation2 + $0x19] sm:$0x1]
    %v230 = vld [vmem:[#allocation2 + $0x21] sm:$0x1]
    %v231 = vld [vmem:[#allocation2 + $0x29] sm:$0x1]
    %v232 = vld [vmem:[#allocation2 + $0x31] sm:$0x1]
    %v233 = vld [vmem:[#allocation2 + $0x39] sm:$0x1]
    %v234 = vpack.c.bf16 %v226, %v226
    %v235 = vpack.c.bf16 %v227, %v227
    %v236 = vpack.c.bf16 %v228, %v228
    %v237 = vpack.c.bf16 %v229, %v229
    %v238 = vpack.c.bf16 %v230, %v230
    %v239 = vpack.c.bf16 %v231, %v231
    %v240 = vpack.c.bf16 %v232, %v232
    %v241 = vpack.c.bf16 %v233, %v233
    %v250 = vunpack.c.l.b16 %v234
    %v251 = vunpack.c.l.b16 %v235
    %v252 = vunpack.c.l.b16 %v236
    %v253 = vunpack.c.l.b16 %v237
    %v254 = vunpack.c.l.b16 %v238
    %v255 = vunpack.c.l.b16 %v239
    %v256 = vunpack.c.l.b16 %v240
    %v257 = vunpack.c.l.b16 %v241
    %v258 = vrot.slane %v251, 7
    %v259 = vsel %vm107, %v258, %v250
    %v260 = vrot.slane %v252, 6
    %v261 = vsel %vm110, %v260, %v259
    %v262 = vrot.slane %v253, 5
    %v263 = vsel %vm113, %v262, %v261
    %v264 = vrot.slane %v254, 4
    %v265 = vsel %vm116, %v264, %v263
    %v266 = vrot.slane %v255, 3
    %v267 = vsel %vm119, %v266, %v265
    %v268 = vrot.slane %v256, 2
    %v269 = vsel %vm122, %v268, %v267
    %v270 = vrot.slane %v257, 1
    %v271 = vsel %vm125, %v270, %v269
    %v272 = vpack.c.b16 %v271, %v271
    %v274 = vsel %vm138, %v272, 0
    %276 = vmatprep.subr.bf16.mxu0 %v135
    %277 = vmatpush1.bf16.msra.mxu0 %v134
    %278 = vmatprep.subr.bf16.mxu0 0
    %279 = vmatpush1.bf16.msra.mxu0 0
    %280 = vmatprep.subr.bf16.mxu0 0
    %281 = vmatpush1.bf16.msra.mxu0 0
    %282 = vmatprep.subr.bf16.mxu0 0
    %283 = vmatpush1.bf16.msra.mxu0 0
    %284 = vmatprep.subr.bf16.mxu0 0
    %285 = vmatpush1.bf16.msra.mxu0 0
    %286 = vmatprep.subr.bf16.mxu0 0
    %287 = vmatpush1.bf16.msra.mxu0 0
    %288 = vmatprep.subr.bf16.mxu0 0
    %289 = vmatpush1.bf16.msra.mxu0 0
    %290 = vmatprep.subr.bf16.mxu0 0
    %291 = vmatpush1.bf16.msra.mxu0 0
    %292 = vmatprep.subr.bf16.mxu0 0
    %293 = vmatpush1.bf16.msra.mxu0 0
    %294 = vmatprep.subr.bf16.mxu0 0
    %295 = vmatpush1.bf16.msra.mxu0 0
    %296 = vmatprep.subr.bf16.mxu0 0
    %297 = vmatpush1.bf16.msra.mxu0 0
    %298 = vmatprep.subr.bf16.mxu0 0
    %299 = vmatpush1.bf16.msra.mxu0 0
    %300 = vmatprep.subr.bf16.mxu0 0
    %301 = vmatpush1.bf16.msra.mxu0 0
    %302 = vmatprep.subr.bf16.mxu0 0
    %303 = vmatpush1.bf16.msra.mxu0 0
    %304 = vmatprep.subr.bf16.mxu0 0
    %305 = vmatpush1.bf16.msra.mxu0 0
    %306 = vmatprep.subr.bf16.mxu0 0
    %307 = vmatpush1.bf16.msra.mxu0 0
    %308 = vmatprep.mubr.bf16.mxu0 0
    %309 = vmatmul.mubr.bf16.gmra.mrb[0].mxu0 %v274
    %v310 = vpop.f32.mrb[0].mxu0
    %v311 = vadd.f32 0.0, %v310
    %v312 = vpop.f32.mrb[0].mxu0
    %v313 = vadd.f32 0.0, %v312
    %v314 = vpop.f32.mrb[0].mxu0
    %v315 = vpop.f32.mrb[0].mxu0
    %316 = vdwg.mxu0
    %v317 = vadd.f32 %v67, %v311
    %v318 = vadd.f32 %v71, %v313
    %v319 = vpack.c.bf16 %v220, %v220
    %v328 = vunpack.c.l.b16 %v54
    %v329 = vunpack.c.h.b16 %v54
    %v330 = vunpack.c.l.b16 %v55
    %v331 = vunpack.c.h.b16 %v55
    %v332 = vunpack.c.l.b16 %v56
    %v333 = vunpack.c.h.b16 %v56
    %v334 = vunpack.c.l.b16 %v57
    %v335 = vunpack.c.h.b16 %v57
    %v336 = vunpack.c.l.b16 %v58
    %v337 = vunpack.c.h.b16 %v58
    %v338 = vunpack.c.l.b16 %v59
    %v339 = vunpack.c.h.b16 %v59
    %v340 = vunpack.c.l.b16 %v60
    %v341 = vunpack.c.h.b16 %v60
    %v342 = vunpack.c.l.b16 %v61
    %v343 = vunpack.c.h.b16 %v61
    %v344 = vpack.c.b16 %v330, %v328
    %v345 = vpack.c.b16 %v331, %v329
    %v346 = vpack.c.b16 %v334, %v332
    %v347 = vpack.c.b16 %v335, %v333
    %v348 = vpack.c.b16 %v338, %v336
    %v349 = vpack.c.b16 %v339, %v337
    %v350 = vpack.c.b16 %v342, %v340
    %v351 = vpack.c.b16 %v343, %v341
    %vm360 = vcmask 523264
    %v362 = vsel %vm360, %v319, 0
    %364 = vmatprep.subr.bf16.mxu0 %v345
    %365 = vmatpush1.bf16.msra.mxu0 %v344
    %366 = vmatprep.subr.bf16.mxu0 %v347
    %367 = vmatpush1.bf16.msra.mxu0 %v346
    %368 = vmatprep.subr.bf16.mxu0 %v349
    %369 = vmatpush1.bf16.msra.mxu0 %v348
    %370 = vmatprep.subr.bf16.mxu0 %v351
    %371 = vmatpush1.bf16.msra.mxu0 %v350
    %372 = vmatprep.subr.bf16.mxu0 0
    %373 = vmatpush1.bf16.msra.mxu0 0
    %374 = vmatprep.subr.bf16.mxu0 0
    %375 = vmatpush1.bf16.msra.mxu0 0
    %376 = vmatprep.subr.bf16.mxu0 0
    %377 = vmatpush1.bf16.msra.mxu0 0
    %378 = vmatprep.subr.bf16.mxu0 0
    %379 = vmatpush1.bf16.msra.mxu0 0
    %380 = vmatprep.subr.bf16.mxu0 0
    %381 = vmatpush1.bf16.msra.mxu0 0
    %382 = vmatprep.subr.bf16.mxu0 0
    %383 = vmatpush1.bf16.msra.mxu0 0
    %384 = vmatprep.subr.bf16.mxu0 0
    %385 = vmatpush1.bf16.msra.mxu0 0
    %386 = vmatprep.subr.bf16.mxu0 0
    %387 = vmatpush1.bf16.msra.mxu0 0
    %388 = vmatprep.subr.bf16.mxu0 0
    %389 = vmatpush1.bf16.msra.mxu0 0
    %390 = vmatprep.subr.bf16.mxu0 0
    %391 = vmatpush1.bf16.msra.mxu0 0
    %392 = vmatprep.subr.bf16.mxu0 0
    %393 = vmatpush1.bf16.msra.mxu0 0
    %394 = vmatprep.subr.bf16.mxu0 0
    %395 = vmatpush1.bf16.msra.mxu0 0
    %396 = vmatprep.mubr.bf16.mxu0 0
    %397 = vmatmul.mubr.bf16.gmra.mrb[0].mxu0 %v362
    %v398 = vpop.f32.mrb[0].mxu0
    %v399 = vadd.f32 0.0, %v398
    %v400 = vpop.f32.mrb[0].mxu0
    %v401 = vadd.f32 0.0, %v400
    %v402 = vpop.f32.mrb[0].mxu0
    %v403 = vpop.f32.mrb[0].mxu0
    %404 = vdwg.mxu0
    %v405 = vadd.f32 %v317, %v399
    %v406 = vadd.f32 %v318, %v401
    %v407 = vxor.u32 %v405, 2147483648
    %v408 = vxor.u32 %v406, 2147483648
    %v409 = vmul.f32 %v407, 1.442695
    %v410 = vpow.pop %v409
    %v411 = vmul.f32 %v408, 1.442695
    %v412 = vpow.pop %v411
    %v413 = vadd.f32 %v410, 1.0
    %v414 = vadd.f32 %v412, 1.0
    %v415 = vrcp.pop %v413
    %v416 = vmul.f32 1.0, %v415
    %v417 = vrcp.pop %v414
    %v418 = vmul.f32 1.0, %v417
    %v419 = vtanh.pop %v406
    %v420 = vmul.f32 %v416, %v225
    %422 = vrot.lane.b32.xlu0 %v419, 64
    %v423 = vpop.permute.xlu0 %422
    %v425 = vmul.f32 %v416, %v423
    %427 = vrot.lane.b32.xlu0 %v425, 64
    %v428 = vpop.permute.xlu0 %427
    %v430 = vadd.f32 %v420, %v428
    %v431 = vtanh.pop %v430
    %433 = vrot.lane.b32.xlu0 %v431, 64
    %v434 = vpop.permute.xlu0 %433
    %v436 = vmul.f32 %v418, %v434
    %v437 = vld [vmem:[#allocation2 + $0x2] sm:$0x1]
    %v438 = vld [vmem:[#allocation2 + $0xa] sm:$0x1]
    %v439 = vld [vmem:[#allocation2 + $0x12] sm:$0x1]
    %v440 = vld [vmem:[#allocation2 + $0x1a] sm:$0x1]
    %v441 = vld [vmem:[#allocation2 + $0x22] sm:$0x1]
    %v442 = vld [vmem:[#allocation2 + $0x2a] sm:$0x1]
    %v443 = vld [vmem:[#allocation2 + $0x32] sm:$0x1]
    %v444 = vld [vmem:[#allocation2 + $0x3a] sm:$0x1]
    %v445 = vpack.c.bf16 %v437, %v437
    %v446 = vpack.c.bf16 %v438, %v438
    %v447 = vpack.c.bf16 %v439, %v439
    %v448 = vpack.c.bf16 %v440, %v440
    %v449 = vpack.c.bf16 %v441, %v441
    %v450 = vpack.c.bf16 %v442, %v442
    %v451 = vpack.c.bf16 %v443, %v443
    %v452 = vpack.c.bf16 %v444, %v444
    %v461 = vunpack.c.l.b16 %v445
    %v462 = vunpack.c.l.b16 %v446
    %v463 = vunpack.c.l.b16 %v447
    %v464 = vunpack.c.l.b16 %v448
    %v465 = vunpack.c.l.b16 %v449
    %v466 = vunpack.c.l.b16 %v450
    %v467 = vunpack.c.l.b16 %v451
    %v468 = vunpack.c.l.b16 %v452
    %v469 = vrot.slane %v462, 7
    %v470 = vsel %vm107, %v469, %v461
    %v471 = vrot.slane %v463, 6
    %v472 = vsel %vm110, %v471, %v470
    %v473 = vrot.slane %v464, 5
    %v474 = vsel %vm113, %v473, %v472
    %v475 = vrot.slane %v465, 4
    %v476 = vsel %vm116, %v475, %v474
    %v477 = vrot.slane %v466, 3
    %v478 = vsel %vm119, %v477, %v476
    %v479 = vrot.slane %v467, 2
    %v480 = vsel %vm122, %v479, %v478
    %v481 = vrot.slane %v468, 1
    %v482 = vsel %vm125, %v481, %v480
    %v483 = vpack.c.b16 %v482, %v482
    %v485 = vsel %vm138, %v483, 0
    %487 = vmatprep.subr.bf16.mxu0 %v135
    %488 = vmatpush1.bf16.msra.mxu0 %v134
    %489 = vmatprep.subr.bf16.mxu0 0
    %490 = vmatpush1.bf16.msra.mxu0 0
    %491 = vmatprep.subr.bf16.mxu0 0
    %492 = vmatpush1.bf16.msra.mxu0 0
    %493 = vmatprep.subr.bf16.mxu0 0
    %494 = vmatpush1.bf16.msra.mxu0 0
    %495 = vmatprep.subr.bf16.mxu0 0
    %496 = vmatpush1.bf16.msra.mxu0 0
    %497 = vmatprep.subr.bf16.mxu0 0
    %498 = vmatpush1.bf16.msra.mxu0 0
    %499 = vmatprep.subr.bf16.mxu0 0
    %500 = vmatpush1.bf16.msra.mxu0 0
    %501 = vmatprep.subr.bf16.mxu0 0
    %502 = vmatpush1.bf16.msra.mxu0 0
    %503 = vmatprep.subr.bf16.mxu0 0
    %504 = vmatpush1.bf16.msra.mxu0 0
    %505 = vmatprep.subr.bf16.mxu0 0
    %506 = vmatpush1.bf16.msra.mxu0 0
    %507 = vmatprep.subr.bf16.mxu0 0
    %508 = vmatpush1.bf16.msra.mxu0 0
    %509 = vmatprep.subr.bf16.mxu0 0
    %510 = vmatpush1.bf16.msra.mxu0 0
    %511 = vmatprep.subr.bf16.mxu0 0
    %512 = vmatpush1.bf16.msra.mxu0 0
    %513 = vmatprep.subr.bf16.mxu0 0
    %514 = vmatpush1.bf16.msra.mxu0 0
    %515 = vmatprep.subr.bf16.mxu0 0
    %516 = vmatpush1.bf16.msra.mxu0 0
    %517 = vmatprep.subr.bf16.mxu0 0
    %518 = vmatpush1.bf16.msra.mxu0 0
    %519 = vmatprep.mubr.bf16.mxu0 0
    %520 = vmatmul.mubr.bf16.gmra.mrb[0].mxu0 %v485
    %v521 = vpop.f32.mrb[0].mxu0
    %v522 = vadd.f32 0.0, %v521
    %v523 = vpop.f32.mrb[0].mxu0
    %v524 = vadd.f32 0.0, %v523
    %v525 = vpop.f32.mrb[0].mxu0
    %v526 = vpop.f32.mrb[0].mxu0
    %527 = vdwg.mxu0
    %v528 = vadd.f32 %v67, %v522
    %v529 = vadd.f32 %v71, %v524
    %v530 = vpack.c.bf16 %v436, %v436
    %v532 = vsel %vm360, %v530, 0
    %534 = vmatprep.subr.bf16.mxu0 %v345
    %535 = vmatpush1.bf16.msra.mxu0 %v344
    %536 = vmatprep.subr.bf16.mxu0 %v347
    %537 = vmatpush1.bf16.msra.mxu0 %v346
    %538 = vmatprep.subr.bf16.mxu0 %v349
    %539 = vmatpush1.bf16.msra.mxu0 %v348
    %540 = vmatprep.subr.bf16.mxu0 %v351
    %541 = vmatpush1.bf16.msra.mxu0 %v350
    %542 = vmatprep.subr.bf16.mxu0 0
    %543 = vmatpush1.bf16.msra.mxu0 0
    %544 = vmatprep.subr.bf16.mxu0 0
    %545 = vmatpush1.bf16.msra.mxu0 0
    %546 = vmatprep.subr.bf16.mxu0 0
    %547 = vmatpush1.bf16.msra.mxu0 0
    %548 = vmatprep.subr.bf16.mxu0 0
    %549 = vmatpush1.bf16.msra.mxu0 0
    %550 = vmatprep.subr.bf16.mxu0 0
    %551 = vmatpush1.bf16.msra.mxu0 0
    %552 = vmatprep.subr.bf16.mxu0 0
    %553 = vmatpush1.bf16.msra.mxu0 0
    %554 = vmatprep.subr.bf16.mxu0 0
    %555 = vmatpush1.bf16.msra.mxu0 0
    %556 = vmatprep.subr.bf16.mxu0 0
    %557 = vmatpush1.bf16.msra.mxu0 0
    %558 = vmatprep.subr.bf16.mxu0 0
    %559 = vmatpush1.bf16.msra.mxu0 0
    %560 = vmatprep.subr.bf16.mxu0 0
    %561 = vmatpush1.bf16.msra.mxu0 0
    %562 = vmatprep.subr.bf16.mxu0 0
    %563 = vmatpush1.bf16.msra.mxu0 0
    %564 = vmatprep.subr.bf16.mxu0 0
    %565 = vmatpush1.bf16.msra.mxu0 0
    %566 = vmatprep.mubr.bf16.mxu0 0
    %567 = vmatmul.mubr.bf16.gmra.mrb[0].mxu0 %v532
    %v568 = vpop.f32.mrb[0].mxu0
    %v569 = vadd.f32 0.0, %v568
    %v570 = vpop.f32.mrb[0].mxu0
    %v571 = vadd.f32 0.0, %v570
    %v572 = vpop.f32.mrb[0].mxu0
    %v573 = vpop.f32.mrb[0].mxu0
    %574 = vdwg.mxu0
    %v575 = vadd.f32 %v528, %v569
    %v576 = vadd.f32 %v529, %v571
    %v577 = vxor.u32 %v575, 2147483648
    %v578 = vxor.u32 %v576, 2147483648
    %v579 = vmul.f32 %v577, 1.442695
    %v580 = vpow.pop %v579
    %v581 = vmul.f32 %v578, 1.442695
    %v582 = vpow.pop %v581
    %v583 = vadd.f32 %v580, 1.0
    %v584 = vadd.f32 %v582, 1.0
    %v585 = vrcp.pop %v583
    %v586 = vmul.f32 1.0, %v585
    %v587 = vrcp.pop %v584
    %v588 = vmul.f32 1.0, %v587
    %v589 = vtanh.pop %v576
    %v590 = vmul.f32 %v586, %v430
    %592 = vrot.lane.b32.xlu0 %v589, 64
    %v593 = vpop.permute.xlu0 %592
    %v595 = vmul.f32 %v586, %v593
    %597 = vrot.lane.b32.xlu0 %v595, 64
    %v598 = vpop.permute.xlu0 %597
    %v600 = vadd.f32 %v590, %v598
    %v601 = vtanh.pop %v600
    %603 = vrot.lane.b32.xlu0 %v601, 64
    %v604 = vpop.permute.xlu0 %603
    %v606 = vmul.f32 %v588, %v604
    %v607 = vld [vmem:[#allocation2 + $0x3] sm:$0x1]
    %v608 = vld [vmem:[#allocation2 + $0xb] sm:$0x1]
    %v609 = vld [vmem:[#allocation2 + $0x13] sm:$0x1]
    %v610 = vld [vmem:[#allocation2 + $0x1b] sm:$0x1]
    %v611 = vld [vmem:[#allocation2 + $0x23] sm:$0x1]
    %v612 = vld [vmem:[#allocation2 + $0x2b] sm:$0x1]
    %v613 = vld [vmem:[#allocation2 + $0x33] sm:$0x1]
    %v614 = vld [vmem:[#allocation2 + $0x3b] sm:$0x1]
    %v615 = vpack.c.bf16 %v607, %v607
    %v616 = vpack.c.bf16 %v608, %v608
    %v617 = vpack.c.bf16 %v609, %v609
    %v618 = vpack.c.bf16 %v610, %v610
    %v619 = vpack.c.bf16 %v611, %v611
    %v620 = vpack.c.bf16 %v612, %v612
    %v621 = vpack.c.bf16 %v613, %v613
    %v622 = vpack.c.bf16 %v614, %v614
    %v631 = vunpack.c.l.b16 %v615
    %v632 = vunpack.c.l.b16 %v616
    %v633 = vunpack.c.l.b16 %v617
    %v634 = vunpack.c.l.b16 %v618
    %v635 = vunpack.c.l.b16 %v619
    %v636 = vunpack.c.l.b16 %v620
    %v637 = vunpack.c.l.b16 %v621
    %v638 = vunpack.c.l.b16 %v622
    %v639 = vrot.slane %v632, 7
    %v640 = vsel %vm107, %v639, %v631
    %v641 = vrot.slane %v633, 6
    %v642 = vsel %vm110, %v641, %v640
    %v643 = vrot.slane %v634, 5
    %v644 = vsel %vm113, %v643, %v642
    %v645 = vrot.slane %v635, 4
    %v646 = vsel %vm116, %v645, %v644
    %v647 = vrot.slane %v636, 3
    %v648 = vsel %vm119, %v647, %v646
    %v649 = vrot.slane %v637, 2
    %v650 = vsel %vm122, %v649, %v648
    %v651 = vrot.slane %v638, 1
    %v652 = vsel %vm125, %v651, %v650
    %v653 = vpack.c.b16 %v652, %v652
    %v655 = vsel %vm138, %v653, 0
    %657 = vmatprep.subr.bf16.mxu0 %v135
    %658 = vmatpush1.bf16.msra.mxu0 %v134
    %659 = vmatprep.subr.bf16.mxu0 0
    %660 = vmatpush1.bf16.msra.mxu0 0
    %661 = vmatprep.subr.bf16.mxu0 0
    %662 = vmatpush1.bf16.msra.mxu0 0
    %663 = vmatprep.subr.bf16.mxu0 0
    %664 = vmatpush1.bf16.msra.mxu0 0
    %665 = vmatprep.subr.bf16.mxu0 0
    %666 = vmatpush1.bf16.msra.mxu0 0
    %667 = vmatprep.subr.bf16.mxu0 0
    %668 = vmatpush1.bf16.msra.mxu0 0
    %669 = vmatprep.subr.bf16.mxu0 0
    %670 = vmatpush1.bf16.msra.mxu0 0
    %671 = vmatprep.subr.bf16.mxu0 0
    %672 = vmatpush1.bf16.msra.mxu0 0
    %673 = vmatprep.subr.bf16.mxu0 0
    %674 = vmatpush1.bf16.msra.mxu0 0
    %675 = vmatprep.subr.bf16.mxu0 0
    %676 = vmatpush1.bf16.msra.mxu0 0
    %677 = vmatprep.subr.bf16.mxu0 0
    %678 = vmatpush1.bf16.msra.mxu0 0
    %679 = vmatprep.subr.bf16.mxu0 0
    %680 = vmatpush1.bf16.msra.mxu0 0
    %681 = vmatprep.subr.bf16.mxu0 0
    %682 = vmatpush1.bf16.msra.mxu0 0
    %683 = vmatprep.subr.bf16.mxu0 0
    %684 = vmatpush1.bf16.msra.mxu0 0
    %685 = vmatprep.subr.bf16.mxu0 0
    %686 = vmatpush1.bf16.msra.mxu0 0
    %687 = vmatprep.subr.bf16.mxu0 0
    %688 = vmatpush1.bf16.msra.mxu0 0
    %689 = vmatprep.mubr.bf16.mxu0 0
    %690 = vmatmul.mubr.bf16.gmra.mrb[0].mxu0 %v655
    %v691 = vpop.f32.mrb[0].mxu0
    %v692 = vadd.f32 0.0, %v691
    %v693 = vpop.f32.mrb[0].mxu0
    %v694 = vadd.f32 0.0, %v693
    %v695 = vpop.f32.mrb[0].mxu0
    %v696 = vpop.f32.mrb[0].mxu0
    %697 = vdwg.mxu0
    %v698 = vadd.f32 %v67, %v692
    %v699 = vadd.f32 %v71, %v694
    %v700 = vpack.c.bf16 %v606, %v606
    %v702 = vsel %vm360, %v700, 0
    %704 = vmatprep.subr.bf16.mxu0 %v345
    %705 = vmatpush1.bf16.msra.mxu0 %v344
    %706 = vmatprep.subr.bf16.mxu0 %v347
    %707 = vmatpush1.bf16.msra.mxu0 %v346
    %708 = vmatprep.subr.bf16.mxu0 %v349
    %709 = vmatpush1.bf16.msra.mxu0 %v348
    %710 = vmatprep.subr.bf16.mxu0 %v351
    %711 = vmatpush1.bf16.msra.mxu0 %v350
    %712 = vmatprep.subr.bf16.mxu0 0
    %713 = vmatpush1.bf16.msra.mxu0 0
    %714 = vmatprep.subr.bf16.mxu0 0
    %715 = vmatpush1.bf16.msra.mxu0 0
    %716 = vmatprep.subr.bf16.mxu0 0
    %717 = vmatpush1.bf16.msra.mxu0 0
    %718 = vmatprep.subr.bf16.mxu0 0
    %719 = vmatpush1.bf16.msra.mxu0 0
    %720 = vmatprep.subr.bf16.mxu0 0
    %721 = vmatpush1.bf16.msra.mxu0 0
    %722 = vmatprep.subr.bf16.mxu0 0
    %723 = vmatpush1.bf16.msra.mxu0 0
    %724 = vmatprep.subr.bf16.mxu0 0
    %725 = vmatpush1.bf16.msra.mxu0 0
    %726 = vmatprep.subr.bf16.mxu0 0
    %727 = vmatpush1.bf16.msra.mxu0 0
    %728 = vmatprep.subr.bf16.mxu0 0
    %729 = vmatpush1.bf16.msra.mxu0 0
    %730 = vmatprep.subr.bf16.mxu0 0
    %731 = vmatpush1.bf16.msra.mxu0 0
    %732 = vmatprep.subr.bf16.mxu0 0
    %733 = vmatpush1.bf16.msra.mxu0 0
    %734 = vmatprep.subr.bf16.mxu0 0
    %735 = vmatpush1.bf16.msra.mxu0 0
    %736 = vmatprep.mubr.bf16.mxu0 0
    %737 = vmatmul.mubr.bf16.gmra.mrb[0].mxu0 %v702
    %v738 = vpop.f32.mrb[0].mxu0
    %v739 = vadd.f32 0.0, %v738
    %v740 = vpop.f32.mrb[0].mxu0
    %v741 = vadd.f32 0.0, %v740
    %v742 = vpop.f32.mrb[0].mxu0
    %v743 = vpop.f32.mrb[0].mxu0
    %744 = vdwg.mxu0
    %v745 = vadd.f32 %v698, %v739
    %v746 = vadd.f32 %v699, %v741
    %v747 = vxor.u32 %v745, 2147483648
    %v748 = vxor.u32 %v746, 2147483648
    %v749 = vmul.f32 %v747, 1.442695
    %v750 = vpow.pop %v749
    %v751 = vmul.f32 %v748, 1.442695
    %v752 = vpow.pop %v751
    %v753 = vadd.f32 %v750, 1.0
    %v754 = vadd.f32 %v752, 1.0
    %v755 = vrcp.pop %v753
    %v756 = vmul.f32 1.0, %v755
    %v757 = vrcp.pop %v754
    %v758 = vmul.f32 1.0, %v757
    %v759 = vtanh.pop %v746
    %v760 = vmul.f32 %v756, %v600
    %762 = vrot.lane.b32.xlu0 %v759, 64
    %v763 = vpop.permute.xlu0 %762
    %v765 = vmul.f32 %v756, %v763
    %767 = vrot.lane.b32.xlu0 %v765, 64
    %v768 = vpop.permute.xlu0 %767
    %v770 = vadd.f32 %v760, %v768
    %v771 = vtanh.pop %v770
    %773 = vrot.lane.b32.xlu0 %v771, 64
    %v774 = vpop.permute.xlu0 %773
    %v776 = vmul.f32 %v758, %v774
    %v777 = vld [vmem:[#allocation2 + $0x4] sm:$0x1]
    %v778 = vld [vmem:[#allocation2 + $0xc] sm:$0x1]
    %v779 = vld [vmem:[#allocation2 + $0x14] sm:$0x1]
    %v780 = vld [vmem:[#allocation2 + $0x1c] sm:$0x1]
    %v781 = vld [vmem:[#allocation2 + $0x24] sm:$0x1]
    %v782 = vld [vmem:[#allocation2 + $0x2c] sm:$0x1]
    %v783 = vld [vmem:[#allocation2 + $0x34] sm:$0x1]
    %v784 = vld [vmem:[#allocation2 + $0x3c] sm:$0x1]
    %v785 = vpack.c.bf16 %v777, %v777
    %v786 = vpack.c.bf16 %v778, %v778
    %v787 = vpack.c.bf16 %v779, %v779
    %v788 = vpack.c.bf16 %v780, %v780
    %v789 = vpack.c.bf16 %v781, %v781
    %v790 = vpack.c.bf16 %v782, %v782
    %v791 = vpack.c.bf16 %v783, %v783
    %v792 = vpack.c.bf16 %v784, %v784
    %v801 = vunpack.c.l.b16 %v785
    %v802 = vunpack.c.l.b16 %v786
    %v803 = vunpack.c.l.b16 %v787
    %v804 = vunpack.c.l.b16 %v788
    %v805 = vunpack.c.l.b16 %v789
    %v806 = vunpack.c.l.b16 %v790
    %v807 = vunpack.c.l.b16 %v791
    %v808 = vunpack.c.l.b16 %v792
    %v809 = vrot.slane %v802, 7
    %v810 = vsel %vm107, %v809, %v801
    %v811 = vrot.slane %v803, 6
    %v812 = vsel %vm110, %v811, %v810
    %v813 = vrot.slane %v804, 5
    %v814 = vsel %vm113, %v813, %v812
    %v815 = vrot.slane %v805, 4
    %v816 = vsel %vm116, %v815, %v814
    %v817 = vrot.slane %v806, 3
    %v818 = vsel %vm119, %v817, %v816
    %v819 = vrot.slane %v807, 2
    %v820 = vsel %vm122, %v819, %v818
    %v821 = vrot.slane %v808, 1
    %v822 = vsel %vm125, %v821, %v820
    %v823 = vpack.c.b16 %v822, %v822
    %v825 = vsel %vm138, %v823, 0
    %827 = vmatprep.subr.bf16.mxu0 %v135
    %828 = vmatpush1.bf16.msra.mxu0 %v134
    %829 = vmatprep.subr.bf16.mxu0 0
    %830 = vmatpush1.bf16.msra.mxu0 0
    %831 = vmatprep.subr.bf16.mxu0 0
    %832 = vmatpush1.bf16.msra.mxu0 0
    %833 = vmatprep.subr.bf16.mxu0 0
    %834 = vmatpush1.bf16.msra.mxu0 0
    %835 = vmatprep.subr.bf16.mxu0 0
    %836 = vmatpush1.bf16.msra.mxu0 0
    %837 = vmatprep.subr.bf16.mxu0 0
    %838 = vmatpush1.bf16.msra.mxu0 0
    %839 = vmatprep.subr.bf16.mxu0 0
    %840 = vmatpush1.bf16.msra.mxu0 0
    %841 = vmatprep.subr.bf16.mxu0 0
    %842 = vmatpush1.bf16.msra.mxu0 0
    %843 = vmatprep.subr.bf16.mxu0 0
    %844 = vmatpush1.bf16.msra.mxu0 0
    %845 = vmatprep.subr.bf16.mxu0 0
    %846 = vmatpush1.bf16.msra.mxu0 0
    %847 = vmatprep.subr.bf16.mxu0 0
    %848 = vmatpush1.bf16.msra.mxu0 0
    %849 = vmatprep.subr.bf16.mxu0 0
    %850 = vmatpush1.bf16.msra.mxu0 0
    %851 = vmatprep.subr.bf16.mxu0 0
    %852 = vmatpush1.bf16.msra.mxu0 0
    %853 = vmatprep.subr.bf16.mxu0 0
    %854 = vmatpush1.bf16.msra.mxu0 0
    %855 = vmatprep.subr.bf16.mxu0 0
    %856 = vmatpush1.bf16.msra.mxu0 0
    %857 = vmatprep.subr.bf16.mxu0 0
    %858 = vmatpush1.bf16.msra.mxu0 0
    %859 = vmatprep.mubr.bf16.mxu0 0
    %860 = vmatmul.mubr.bf16.gmra.mrb[0].mxu0 %v825
    %v861 = vpop.f32.mrb[0].mxu0
    %v862 = vadd.f32 0.0, %v861
    %v863 = vpop.f32.mrb[0].mxu0
    %v864 = vadd.f32 0.0, %v863
    %v865 = vpop.f32.mrb[0].mxu0
    %v866 = vpop.f32.mrb[0].mxu0
    %867 = vdwg.mxu0
    %v868 = vadd.f32 %v67, %v862
    %v869 = vadd.f32 %v71, %v864
    %v870 = vpack.c.bf16 %v776, %v776
    %v872 = vsel %vm360, %v870, 0
    %874 = vmatprep.subr.bf16.mxu0 %v345
    %875 = vmatpush1.bf16.msra.mxu0 %v344
    %876 = vmatprep.subr.bf16.mxu0 %v347
    %877 = vmatpush1.bf16.msra.mxu0 %v346
    %878 = vmatprep.subr.bf16.mxu0 %v349
    %879 = vmatpush1.bf16.msra.mxu0 %v348
    %880 = vmatprep.subr.bf16.mxu0 %v351
    %881 = vmatpush1.bf16.msra.mxu0 %v350
    %882 = vmatprep.subr.bf16.mxu0 0
    %883 = vmatpush1.bf16.msra.mxu0 0
    %884 = vmatprep.subr.bf16.mxu0 0
    %885 = vmatpush1.bf16.msra.mxu0 0
    %886 = vmatprep.subr.bf16.mxu0 0
    %887 = vmatpush1.bf16.msra.mxu0 0
    %888 = vmatprep.subr.bf16.mxu0 0
    %889 = vmatpush1.bf16.msra.mxu0 0
    %890 = vmatprep.subr.bf16.mxu0 0
    %891 = vmatpush1.bf16.msra.mxu0 0
    %892 = vmatprep.subr.bf16.mxu0 0
    %893 = vmatpush1.bf16.msra.mxu0 0
    %894 = vmatprep.subr.bf16.mxu0 0
    %895 = vmatpush1.bf16.msra.mxu0 0
    %896 = vmatprep.subr.bf16.mxu0 0
    %897 = vmatpush1.bf16.msra.mxu0 0
    %898 = vmatprep.subr.bf16.mxu0 0
    %899 = vmatpush1.bf16.msra.mxu0 0
    %900 = vmatprep.subr.bf16.mxu0 0
    %901 = vmatpush1.bf16.msra.mxu0 0
    %902 = vmatprep.subr.bf16.mxu0 0
    %903 = vmatpush1.bf16.msra.mxu0 0
    %904 = vmatprep.subr.bf16.mxu0 0
    %905 = vmatpush1.bf16.msra.mxu0 0
    %906 = vmatprep.mubr.bf16.mxu0 0
    %907 = vmatmul.mubr.bf16.gmra.mrb[0].mxu0 %v872
    %v908 = vpop.f32.mrb[0].mxu0
    %v909 = vadd.f32 0.0, %v908
    %v910 = vpop.f32.mrb[0].mxu0
    %v911 = vadd.f32 0.0, %v910
    %v912 = vpop.f32.mrb[0].mxu0
    %v913 = vpop.f32.mrb[0].mxu0
    %914 = vdwg.mxu0
    %v915 = vadd.f32 %v868, %v909
    %v916 = vadd.f32 %v869, %v911
    %v917 = vxor.u32 %v915, 2147483648
    %v918 = vxor.u32 %v916, 2147483648
    %v919 = vmul.f32 %v917, 1.442695
    %v920 = vpow.pop %v919
    %v921 = vmul.f32 %v918, 1.442695
    %v922 = vpow.pop %v921
    %v923 = vadd.f32 %v920, 1.0
    %v924 = vadd.f32 %v922, 1.0
    %v925 = vrcp.pop %v923
    %v926 = vmul.f32 1.0, %v925
    %v927 = vrcp.pop %v924
    %v928 = vmul.f32 1.0, %v927
    %v929 = vtanh.pop %v916
    %v930 = vmul.f32 %v926, %v770
    %932 = vrot.lane.b32.xlu0 %v929, 64
    %v933 = vpop.permute.xlu0 %932
    %v935 = vmul.f32 %v926, %v933
    %937 = vrot.lane.b32.xlu0 %v935, 64
    %v938 = vpop.permute.xlu0 %937
    %v940 = vadd.f32 %v930, %v938
    %v941 = vtanh.pop %v940
    %943 = vrot.lane.b32.xlu0 %v941, 64
    %v944 = vpop.permute.xlu0 %943
    %v946 = vmul.f32 %v928, %v944
    %v947 = vld [vmem:[#allocation2 + $0x5] sm:$0x1]
    %v948 = vld [vmem:[#allocation2 + $0xd] sm:$0x1]
    %v949 = vld [vmem:[#allocation2 + $0x15] sm:$0x1]
    %v950 = vld [vmem:[#allocation2 + $0x1d] sm:$0x1]
    %v951 = vld [vmem:[#allocation2 + $0x25] sm:$0x1]
    %v952 = vld [vmem:[#allocation2 + $0x2d] sm:$0x1]
    %v953 = vld [vmem:[#allocation2 + $0x35] sm:$0x1]
    %v954 = vld [vmem:[#allocation2 + $0x3d] sm:$0x1]
    %v955 = vpack.c.bf16 %v947, %v947
    %v956 = vpack.c.bf16 %v948, %v948
    %v957 = vpack.c.bf16 %v949, %v949
    %v958 = vpack.c.bf16 %v950, %v950
    %v959 = vpack.c.bf16 %v951, %v951
    %v960 = vpack.c.bf16 %v952, %v952
    %v961 = vpack.c.bf16 %v953, %v953
    %v962 = vpack.c.bf16 %v954, %v954
    %v971 = vunpack.c.l.b16 %v955
    %v972 = vunpack.c.l.b16 %v956
    %v973 = vunpack.c.l.b16 %v957
    %v974 = vunpack.c.l.b16 %v958
    %v975 = vunpack.c.l.b16 %v959
    %v976 = vunpack.c.l.b16 %v960
    %v977 = vunpack.c.l.b16 %v961
    %v978 = vunpack.c.l.b16 %v962
    %v979 = vrot.slane %v972, 7
    %v980 = vsel %vm107, %v979, %v971
    %v981 = vrot.slane %v973, 6
    %v982 = vsel %vm110, %v981, %v980
    %v983 = vrot.slane %v974, 5
    %v984 = vsel %vm113, %v983, %v982
    %v985 = vrot.slane %v975, 4
    %v986 = vsel %vm116, %v985, %v984
    %v987 = vrot.slane %v976, 3
    %v988 = vsel %vm119, %v987, %v986
    %v989 = vrot.slane %v977, 2
    %v990 = vsel %vm122, %v989, %v988
    %v991 = vrot.slane %v978, 1
    %v992 = vsel %vm125, %v991, %v990
    %v993 = vpack.c.b16 %v992, %v992
    %v995 = vsel %vm138, %v993, 0
    %997 = vmatprep.subr.bf16.mxu0 %v135
    %998 = vmatpush1.bf16.msra.mxu0 %v134
    %999 = vmatprep.subr.bf16.mxu0 0
    %1000 = vmatpush1.bf16.msra.mxu0 0
    %1001 = vmatprep.subr.bf16.mxu0 0
    %1002 = vmatpush1.bf16.msra.mxu0 0
    %1003 = vmatprep.subr.bf16.mxu0 0
    %1004 = vmatpush1.bf16.msra.mxu0 0
    %1005 = vmatprep.subr.bf16.mxu0 0
    %1006 = vmatpush1.bf16.msra.mxu0 0
    %1007 = vmatprep.subr.bf16.mxu0 0
    %1008 = vmatpush1.bf16.msra.mxu0 0
    %1009 = vmatprep.subr.bf16.mxu0 0
    %1010 = vmatpush1.bf16.msra.mxu0 0
    %1011 = vmatprep.subr.bf16.mxu0 0
    %1012 = vmatpush1.bf16.msra.mxu0 0
    %1013 = vmatprep.subr.bf16.mxu0 0
    %1014 = vmatpush1.bf16.msra.mxu0 0
    %1015 = vmatprep.subr.bf16.mxu0 0
    %1016 = vmatpush1.bf16.msra.mxu0 0
    %1017 = vmatprep.subr.bf16.mxu0 0
    %1018 = vmatpush1.bf16.msra.mxu0 0
    %1019 = vmatprep.subr.bf16.mxu0 0
    %1020 = vmatpush1.bf16.msra.mxu0 0
    %1021 = vmatprep.subr.bf16.mxu0 0
    %1022 = vmatpush1.bf16.msra.mxu0 0
    %1023 = vmatprep.subr.bf16.mxu0 0
    %1024 = vmatpush1.bf16.msra.mxu0 0
    %1025 = vmatprep.subr.bf16.mxu0 0
    %1026 = vmatpush1.bf16.msra.mxu0 0
    %1027 = vmatprep.subr.bf16.mxu0 0
    %1028 = vmatpush1.bf16.msra.mxu0 0
    %1029 = vmatprep.mubr.bf16.mxu0 0
    %1030 = vmatmul.mubr.bf16.gmra.mrb[0].mxu0 %v995
    %v1031 = vpop.f32.mrb[0].mxu0
    %v1032 = vadd.f32 0.0, %v1031
    %v1033 = vpop.f32.mrb[0].mxu0
    %v1034 = vadd.f32 0.0, %v1033
    %v1035 = vpop.f32.mrb[0].mxu0
    %v1036 = vpop.f32.mrb[0].mxu0
    %1037 = vdwg.mxu0
    %v1038 = vadd.f32 %v67, %v1032
    %v1039 = vadd.f32 %v71, %v1034
    %v1040 = vpack.c.bf16 %v946, %v946
    %v1042 = vsel %vm360, %v1040, 0
    %1044 = vmatprep.subr.bf16.mxu0 %v345
    %1045 = vmatpush1.bf16.msra.mxu0 %v344
    %1046 = vmatprep.subr.bf16.mxu0 %v347
    %1047 = vmatpush1.bf16.msra.mxu0 %v346
    %1048 = vmatprep.subr.bf16.mxu0 %v349
    %1049 = vmatpush1.bf16.msra.mxu0 %v348
    %1050 = vmatprep.subr.bf16.mxu0 %v351
    %1051 = vmatpush1.bf16.msra.mxu0 %v350
    %1052 = vmatprep.subr.bf16.mxu0 0
    %1053 = vmatpush1.bf16.msra.mxu0 0
    %1054 = vmatprep.subr.bf16.mxu0 0
    %1055 = vmatpush1.bf16.msra.mxu0 0
    %1056 = vmatprep.subr.bf16.mxu0 0
    %1057 = vmatpush1.bf16.msra.mxu0 0
    %1058 = vmatprep.subr.bf16.mxu0 0
    %1059 = vmatpush1.bf16.msra.mxu0 0
    %1060 = vmatprep.subr.bf16.mxu0 0
    %1061 = vmatpush1.bf16.msra.mxu0 0
    %1062 = vmatprep.subr.bf16.mxu0 0
    %1063 = vmatpush1.bf16.msra.mxu0 0
    %1064 = vmatprep.subr.bf16.mxu0 0
    %1065 = vmatpush1.bf16.msra.mxu0 0
    %1066 = vmatprep.subr.bf16.mxu0 0
    %1067 = vmatpush1.bf16.msra.mxu0 0
    %1068 = vmatprep.subr.bf16.mxu0 0
    %1069 = vmatpush1.bf16.msra.mxu0 0
    %1070 = vmatprep.subr.bf16.mxu0 0
    %1071 = vmatpush1.bf16.msra.mxu0 0
    %1072 = vmatprep.subr.bf16.mxu0 0
    %1073 = vmatpush1.bf16.msra.mxu0 0
    %1074 = vmatprep.subr.bf16.mxu0 0
    %1075 = vmatpush1.bf16.msra.mxu0 0
    %1076 = vmatprep.mubr.bf16.mxu0 0
    %1077 = vmatmul.mubr.bf16.gmra.mrb[0].mxu0 %v1042
    %v1078 = vpop.f32.mrb[0].mxu0
    %v1079 = vadd.f32 0.0, %v1078
    %v1080 = vpop.f32.mrb[0].mxu0
    %v1081 = vadd.f32 0.0, %v1080
    %v1082 = vpop.f32.mrb[0].mxu0
    %v1083 = vpop.f32.mrb[0].mxu0
    %1084 = vdwg.mxu0
    %v1085 = vadd.f32 %v1038, %v1079
    %v1086 = vadd.f32 %v1039, %v1081
    %v1087 = vxor.u32 %v1085, 2147483648
    %v1088 = vxor.u32 %v1086, 2147483648
    %v1089 = vmul.f32 %v1087, 1.442695
    %v1090 = vpow.pop %v1089
    %v1091 = vmul.f32 %v1088, 1.442695
    %v1092 = vpow.pop %v1091
    %v1093 = vadd.f32 %v1090, 1.0
    %v1094 = vadd.f32 %v1092, 1.0
    %v1095 = vrcp.pop %v1093
    %v1096 = vmul.f32 1.0, %v1095
    %v1097 = vrcp.pop %v1094
    %v1098 = vmul.f32 1.0, %v1097
    %v1099 = vtanh.pop %v1086
    %v1100 = vmul.f32 %v1096, %v940
    %1102 = vrot.lane.b32.xlu0 %v1099, 64
    %v1103 = vpop.permute.xlu0 %1102
    %v1105 = vmul.f32 %v1096, %v1103
    %1107 = vrot.lane.b32.xlu0 %v1105, 64
    %v1108 = vpop.permute.xlu0 %1107
    %v1110 = vadd.f32 %v1100, %v1108
    %v1111 = vtanh.pop %v1110
    %1113 = vrot.lane.b32.xlu0 %v1111, 64
    %v1114 = vpop.permute.xlu0 %1113
    %v1116 = vmul.f32 %v1098, %v1114
    %v1117 = vld [vmem:[#allocation2 + $0x6] sm:$0x1]
    %v1118 = vld [vmem:[#allocation2 + $0xe] sm:$0x1]
    %v1119 = vld [vmem:[#allocation2 + $0x16] sm:$0x1]
    %v1120 = vld [vmem:[#allocation2 + $0x1e] sm:$0x1]
    %v1121 = vld [vmem:[#allocation2 + $0x26] sm:$0x1]
    %v1122 = vld [vmem:[#allocation2 + $0x2e] sm:$0x1]
    %v1123 = vld [vmem:[#allocation2 + $0x36] sm:$0x1]
    %v1124 = vld [vmem:[#allocation2 + $0x3e] sm:$0x1]
    %v1125 = vpack.c.bf16 %v1117, %v1117
    %v1126 = vpack.c.bf16 %v1118, %v1118
    %v1127 = vpack.c.bf16 %v1119, %v1119
    %v1128 = vpack.c.bf16 %v1120, %v1120
    %v1129 = vpack.c.bf16 %v1121, %v1121
    %v1130 = vpack.c.bf16 %v1122, %v1122
    %v1131 = vpack.c.bf16 %v1123, %v1123
    %v1132 = vpack.c.bf16 %v1124, %v1124
    %v1141 = vunpack.c.l.b16 %v1125
    %v1142 = vunpack.c.l.b16 %v1126
    %v1143 = vunpack.c.l.b16 %v1127
    %v1144 = vunpack.c.l.b16 %v1128
    %v1145 = vunpack.c.l.b16 %v1129
    %v1146 = vunpack.c.l.b16 %v1130
    %v1147 = vunpack.c.l.b16 %v1131
    %v1148 = vunpack.c.l.b16 %v1132
    %v1149 = vrot.slane %v1142, 7
    %v1150 = vsel %vm107, %v1149, %v1141
    %v1151 = vrot.slane %v1143, 6
    %v1152 = vsel %vm110, %v1151, %v1150
    %v1153 = vrot.slane %v1144, 5
    %v1154 = vsel %vm113, %v1153, %v1152
    %v1155 = vrot.slane %v1145, 4
    %v1156 = vsel %vm116, %v1155, %v1154
    %v1157 = vrot.slane %v1146, 3
    %v1158 = vsel %vm119, %v1157, %v1156
    %v1159 = vrot.slane %v1147, 2
    %v1160 = vsel %vm122, %v1159, %v1158
    %v1161 = vrot.slane %v1148, 1
    %v1162 = vsel %vm125, %v1161, %v1160
    %v1163 = vpack.c.b16 %v1162, %v1162
    %v1165 = vsel %vm138, %v1163, 0
    %1167 = vmatprep.subr.bf16.mxu0 %v135
    %1168 = vmatpush1.bf16.msra.mxu0 %v134
    %1169 = vmatprep.subr.bf16.mxu0 0
    %1170 = vmatpush1.bf16.msra.mxu0 0
    %1171 = vmatprep.subr.bf16.mxu0 0
    %1172 = vmatpush1.bf16.msra.mxu0 0
    %1173 = vmatprep.subr.bf16.mxu0 0
    %1174 = vmatpush1.bf16.msra.mxu0 0
    %1175 = vmatprep.subr.bf16.mxu0 0
    %1176 = vmatpush1.bf16.msra.mxu0 0
    %1177 = vmatprep.subr.bf16.mxu0 0
    %1178 = vmatpush1.bf16.msra.mxu0 0
    %1179 = vmatprep.subr.bf16.mxu0 0
    %1180 = vmatpush1.bf16.msra.mxu0 0
    %1181 = vmatprep.subr.bf16.mxu0 0
    %1182 = vmatpush1.bf16.msra.mxu0 0
    %1183 = vmatprep.subr.bf16.mxu0 0
    %1184 = vmatpush1.bf16.msra.mxu0 0
    %1185 = vmatprep.subr.bf16.mxu0 0
    %1186 = vmatpush1.bf16.msra.mxu0 0
    %1187 = vmatprep.subr.bf16.mxu0 0
    %1188 = vmatpush1.bf16.msra.mxu0 0
    %1189 = vmatprep.subr.bf16.mxu0 0
    %1190 = vmatpush1.bf16.msra.mxu0 0
    %1191 = vmatprep.subr.bf16.mxu0 0
    %1192 = vmatpush1.bf16.msra.mxu0 0
    %1193 = vmatprep.subr.bf16.mxu0 0
    %1194 = vmatpush1.bf16.msra.mxu0 0
    %1195 = vmatprep.subr.bf16.mxu0 0
    %1196 = vmatpush1.bf16.msra.mxu0 0
    %1197 = vmatprep.subr.bf16.mxu0 0
    %1198 = vmatpush1.bf16.msra.mxu0 0
    %1199 = vmatprep.mubr.bf16.mxu0 0
    %1200 = vmatmul.mubr.bf16.gmra.mrb[0].mxu0 %v1165
    %v1201 = vpop.f32.mrb[0].mxu0
    %v1202 = vadd.f32 0.0, %v1201
    %v1203 = vpop.f32.mrb[0].mxu0
    %v1204 = vadd.f32 0.0, %v1203
    %v1205 = vpop.f32.mrb[0].mxu0
    %v1206 = vpop.f32.mrb[0].mxu0
    %1207 = vdwg.mxu0
    %v1208 = vadd.f32 %v67, %v1202
    %v1209 = vadd.f32 %v71, %v1204
    %v1210 = vpack.c.bf16 %v1116, %v1116
    %v1212 = vsel %vm360, %v1210, 0
    %1214 = vmatprep.subr.bf16.mxu0 %v345
    %1215 = vmatpush1.bf16.msra.mxu0 %v344
    %1216 = vmatprep.subr.bf16.mxu0 %v347
    %1217 = vmatpush1.bf16.msra.mxu0 %v346
    %1218 = vmatprep.subr.bf16.mxu0 %v349
    %1219 = vmatpush1.bf16.msra.mxu0 %v348
    %1220 = vmatprep.subr.bf16.mxu0 %v351
    %1221 = vmatpush1.bf16.msra.mxu0 %v350
    %1222 = vmatprep.subr.bf16.mxu0 0
    %1223 = vmatpush1.bf16.msra.mxu0 0
    %1224 = vmatprep.subr.bf16.mxu0 0
    %1225 = vmatpush1.bf16.msra.mxu0 0
    %1226 = vmatprep.subr.bf16.mxu0 0
    %1227 = vmatpush1.bf16.msra.mxu0 0
    %1228 = vmatprep.subr.bf16.mxu0 0
    %1229 = vmatpush1.bf16.msra.mxu0 0
    %1230 = vmatprep.subr.bf16.mxu0 0
    %1231 = vmatpush1.bf16.msra.mxu0 0
    %1232 = vmatprep.subr.bf16.mxu0 0
    %1233 = vmatpush1.bf16.msra.mxu0 0
    %1234 = vmatprep.subr.bf16.mxu0 0
    %1235 = vmatpush1.bf16.msra.mxu0 0
    %1236 = vmatprep.subr.bf16.mxu0 0
    %1237 = vmatpush1.bf16.msra.mxu0 0
    %1238 = vmatprep.subr.bf16.mxu0 0
    %1239 = vmatpush1.bf16.msra.mxu0 0
    %1240 = vmatprep.subr.bf16.mxu0 0
    %1241 = vmatpush1.bf16.msra.mxu0 0
    %1242 = vmatprep.subr.bf16.mxu0 0
    %1243 = vmatpush1.bf16.msra.mxu0 0
    %1244 = vmatprep.subr.bf16.mxu0 0
    %1245 = vmatpush1.bf16.msra.mxu0 0
    %1246 = vmatprep.mubr.bf16.mxu0 0
    %1247 = vmatmul.mubr.bf16.gmra.mrb[0].mxu0 %v1212
    %v1248 = vpop.f32.mrb[0].mxu0
    %v1249 = vadd.f32 0.0, %v1248
    %v1250 = vpop.f32.mrb[0].mxu0
    %v1251 = vadd.f32 0.0, %v1250
    %v1252 = vpop.f32.mrb[0].mxu0
    %v1253 = vpop.f32.mrb[0].mxu0
    %1254 = vdwg.mxu0
    %v1255 = vadd.f32 %v1208, %v1249
    %v1256 = vadd.f32 %v1209, %v1251
    %v1257 = vxor.u32 %v1255, 2147483648
    %v1258 = vxor.u32 %v1256, 2147483648
    %v1259 = vmul.f32 %v1257, 1.442695
    %v1260 = vpow.pop %v1259
    %v1261 = vmul.f32 %v1258, 1.442695
    %v1262 = vpow.pop %v1261
    %v1263 = vadd.f32 %v1260, 1.0
    %v1264 = vadd.f32 %v1262, 1.0
    %v1265 = vrcp.pop %v1263
    %v1266 = vmul.f32 1.0, %v1265
    %v1267 = vrcp.pop %v1264
    %v1268 = vmul.f32 1.0, %v1267
    %v1269 = vtanh.pop %v1256
    %v1270 = vmul.f32 %v1266, %v1110
    %1272 = vrot.lane.b32.xlu0 %v1269, 64
    %v1273 = vpop.permute.xlu0 %1272
    %v1275 = vmul.f32 %v1266, %v1273
    %1277 = vrot.lane.b32.xlu0 %v1275, 64
    %v1278 = vpop.permute.xlu0 %1277
    %v1280 = vadd.f32 %v1270, %v1278
    %v1281 = vtanh.pop %v1280
    %1283 = vrot.lane.b32.xlu0 %v1281, 64
    %v1284 = vpop.permute.xlu0 %1283
    %v1286 = vmul.f32 %v1268, %v1284
    %v1287 = vld [vmem:[#allocation2 + $0x7] sm:$0x1]
    %v1288 = vld [vmem:[#allocation2 + $0xf] sm:$0x1]
    %v1289 = vld [vmem:[#allocation2 + $0x17] sm:$0x1]
    %v1290 = vld [vmem:[#allocation2 + $0x1f] sm:$0x1]
    %v1291 = vld [vmem:[#allocation2 + $0x27] sm:$0x1]
    %v1292 = vld [vmem:[#allocation2 + $0x2f] sm:$0x1]
    %v1293 = vld [vmem:[#allocation2 + $0x37] sm:$0x1]
    %v1294 = vld [vmem:[#allocation2 + $0x3f] sm:$0x1]
    %v1295 = vpack.c.bf16 %v1287, %v1287
    %v1296 = vpack.c.bf16 %v1288, %v1288
    %v1297 = vpack.c.bf16 %v1289, %v1289
    %v1298 = vpack.c.bf16 %v1290, %v1290
    %v1299 = vpack.c.bf16 %v1291, %v1291
    %v1300 = vpack.c.bf16 %v1292, %v1292
    %v1301 = vpack.c.bf16 %v1293, %v1293
    %v1302 = vpack.c.bf16 %v1294, %v1294
    %v1311 = vunpack.c.l.b16 %v1295
    %v1312 = vunpack.c.l.b16 %v1296
    %v1313 = vunpack.c.l.b16 %v1297
    %v1314 = vunpack.c.l.b16 %v1298
    %v1315 = vunpack.c.l.b16 %v1299
    %v1316 = vunpack.c.l.b16 %v1300
    %v1317 = vunpack.c.l.b16 %v1301
    %v1318 = vunpack.c.l.b16 %v1302
    %v1319 = vrot.slane %v1312, 7
    %v1320 = vsel %vm107, %v1319, %v1311
    %v1321 = vrot.slane %v1313, 6
    %v1322 = vsel %vm110, %v1321, %v1320
    %v1323 = vrot.slane %v1314, 5
    %v1324 = vsel %vm113, %v1323, %v1322
    %v1325 = vrot.slane %v1315, 4
    %v1326 = vsel %vm116, %v1325, %v1324
    %v1327 = vrot.slane %v1316, 3
    %v1328 = vsel %vm119, %v1327, %v1326
    %v1329 = vrot.slane %v1317, 2
    %v1330 = vsel %vm122, %v1329, %v1328
    %v1331 = vrot.slane %v1318, 1
    %v1332 = vsel %vm125, %v1331, %v1330
    %v1333 = vpack.c.b16 %v1332, %v1332
    %v1335 = vsel %vm138, %v1333, 0
    %1337 = vmatprep.subr.bf16.mxu0 %v135
    %1338 = vmatpush1.bf16.msra.mxu0 %v134
    %1339 = vmatprep.subr.bf16.mxu0 0
    %1340 = vmatpush1.bf16.msra.mxu0 0
    %1341 = vmatprep.subr.bf16.mxu0 0
    %1342 = vmatpush1.bf16.msra.mxu0 0
    %1343 = vmatprep.subr.bf16.mxu0 0
    %1344 = vmatpush1.bf16.msra.mxu0 0
    %1345 = vmatprep.subr.bf16.mxu0 0
    %1346 = vmatpush1.bf16.msra.mxu0 0
    %1347 = vmatprep.subr.bf16.mxu0 0
    %1348 = vmatpush1.bf16.msra.mxu0 0
    %1349 = vmatprep.subr.bf16.mxu0 0
    %1350 = vmatpush1.bf16.msra.mxu0 0
    %1351 = vmatprep.subr.bf16.mxu0 0
    %1352 = vmatpush1.bf16.msra.mxu0 0
    %1353 = vmatprep.subr.bf16.mxu0 0
    %1354 = vmatpush1.bf16.msra.mxu0 0
    %1355 = vmatprep.subr.bf16.mxu0 0
    %1356 = vmatpush1.bf16.msra.mxu0 0
    %1357 = vmatprep.subr.bf16.mxu0 0
    %1358 = vmatpush1.bf16.msra.mxu0 0
    %1359 = vmatprep.subr.bf16.mxu0 0
    %1360 = vmatpush1.bf16.msra.mxu0 0
    %1361 = vmatprep.subr.bf16.mxu0 0
    %1362 = vmatpush1.bf16.msra.mxu0 0
    %1363 = vmatprep.subr.bf16.mxu0 0
    %1364 = vmatpush1.bf16.msra.mxu0 0
    %1365 = vmatprep.subr.bf16.mxu0 0
    %1366 = vmatpush1.bf16.msra.mxu0 0
    %1367 = vmatprep.subr.bf16.mxu0 0
    %1368 = vmatpush1.bf16.msra.mxu0 0
    %1369 = vmatprep.mubr.bf16.mxu0 0
    %1370 = vmatmul.mubr.bf16.gmra.mrb[0].mxu0 %v1335
    %v1371 = vpop.f32.mrb[0].mxu0
    %v1372 = vadd.f32 0.0, %v1371
    %v1373 = vpop.f32.mrb[0].mxu0
    %v1374 = vadd.f32 0.0, %v1373
    %v1375 = vpop.f32.mrb[0].mxu0
    %v1376 = vpop.f32.mrb[0].mxu0
    %1377 = vdwg.mxu0
    %v1378 = vadd.f32 %v67, %v1372
    %v1379 = vadd.f32 %v71, %v1374
    %v1380 = vpack.c.bf16 %v1286, %v1286
    %v1382 = vsel %vm360, %v1380, 0
    %1384 = vmatprep.subr.bf16.mxu0 %v345
    %1385 = vmatpush1.bf16.msra.mxu0 %v344
    %1386 = vmatprep.subr.bf16.mxu0 %v347
    %1387 = vmatpush1.bf16.msra.mxu0 %v346
    %1388 = vmatprep.subr.bf16.mxu0 %v349
    %1389 = vmatpush1.bf16.msra.mxu0 %v348
    %1390 = vmatprep.subr.bf16.mxu0 %v351
    %1391 = vmatpush1.bf16.msra.mxu0 %v350
    %1392 = vmatprep.subr.bf16.mxu0 0
    %1393 = vmatpush1.bf16.msra.mxu0 0
    %1394 = vmatprep.subr.bf16.mxu0 0
    %1395 = vmatpush1.bf16.msra.mxu0 0
    %1396 = vmatprep.subr.bf16.mxu0 0
    %1397 = vmatpush1.bf16.msra.mxu0 0
    %1398 = vmatprep.subr.bf16.mxu0 0
    %1399 = vmatpush1.bf16.msra.mxu0 0
    %1400 = vmatprep.subr.bf16.mxu0 0
    %1401 = vmatpush1.bf16.msra.mxu0 0
    %1402 = vmatprep.subr.bf16.mxu0 0
    %1403 = vmatpush1.bf16.msra.mxu0 0
    %1404 = vmatprep.subr.bf16.mxu0 0
    %1405 = vmatpush1.bf16.msra.mxu0 0
    %1406 = vmatprep.subr.bf16.mxu0 0
    %1407 = vmatpush1.bf16.msra.mxu0 0
    %1408 = vmatprep.subr.bf16.mxu0 0
    %1409 = vmatpush1.bf16.msra.mxu0 0
    %1410 = vmatprep.subr.bf16.mxu0 0
    %1411 = vmatpush1.bf16.msra.mxu0 0
    %1412 = vmatprep.subr.bf16.mxu0 0
    %1413 = vmatpush1.bf16.msra.mxu0 0
    %1414 = vmatprep.subr.bf16.mxu0 0
    %1415 = vmatpush1.bf16.msra.mxu0 0
    %1416 = vmatprep.mubr.bf16.mxu0 0
    %1417 = vmatmul.mubr.bf16.gmra.mrb[0].mxu0 %v1382
    %v1418 = vpop.f32.mrb[0].mxu0
    %v1419 = vadd.f32 0.0, %v1418
    %v1420 = vpop.f32.mrb[0].mxu0
    %v1421 = vadd.f32 0.0, %v1420
    %v1422 = vpop.f32.mrb[0].mxu0
    %v1423 = vpop.f32.mrb[0].mxu0
    %1424 = vdwg.mxu0
    %v1425 = vadd.f32 %v1378, %v1419
    %v1426 = vadd.f32 %v1379, %v1421
    %v1427 = vxor.u32 %v1425, 2147483648
    %v1428 = vxor.u32 %v1426, 2147483648
    %v1429 = vmul.f32 %v1427, 1.442695
    %v1430 = vpow.pop %v1429
    %v1431 = vmul.f32 %v1428, 1.442695
    %v1432 = vpow.pop %v1431
    %v1433 = vadd.f32 %v1430, 1.0
    %v1434 = vadd.f32 %v1432, 1.0
    %v1435 = vrcp.pop %v1433
    %v1436 = vmul.f32 1.0, %v1435
    %v1437 = vrcp.pop %v1434
    %v1438 = vmul.f32 1.0, %v1437
    %v1439 = vtanh.pop %v1426
    %v1440 = vmul.f32 %v1436, %v1280
    %1442 = vrot.lane.b32.xlu0 %v1439, 64
    %v1443 = vpop.permute.xlu0 %1442
    %v1445 = vmul.f32 %v1436, %v1443
    %1447 = vrot.lane.b32.xlu0 %v1445, 64
    %v1448 = vpop.permute.xlu0 %1447
    %v1450 = vadd.f32 %v1440, %v1448
    %v1451 = vtanh.pop %v1450
    %1453 = vrot.lane.b32.xlu0 %v1451, 64
    %v1454 = vpop.permute.xlu0 %1453
    %v1456 = vmul.f32 %v1438, %v1454
    %v1457 = vpack.c.bf16 %v1456, %v1456
    %v1459 = vsel %vm360, %v1457, 0
    %1461 = vmatprep.subr.bf16.mxu0 %v345
    %1462 = vmatpush1.bf16.msra.mxu0 %v344
    %1463 = vmatprep.subr.bf16.mxu0 %v347
    %1464 = vmatpush1.bf16.msra.mxu0 %v346
    %1465 = vmatprep.subr.bf16.mxu0 %v349
    %1466 = vmatpush1.bf16.msra.mxu0 %v348
    %1467 = vmatprep.subr.bf16.mxu0 %v351
    %1468 = vmatpush1.bf16.msra.mxu0 %v350
    %1469 = vmatprep.subr.bf16.mxu0 0
    %1470 = vmatpush1.bf16.msra.mxu0 0
    %1471 = vmatprep.subr.bf16.mxu0 0
    %1472 = vmatpush1.bf16.msra.mxu0 0
    %1473 = vmatprep.subr.bf16.mxu0 0
    %1474 = vmatpush1.bf16.msra.mxu0 0
    %1475 = vmatprep.subr.bf16.mxu0 0
    %1476 = vmatpush1.bf16.msra.mxu0 0
    %1477 = vmatprep.subr.bf16.mxu0 0
    %1478 = vmatpush1.bf16.msra.mxu0 0
    %1479 = vmatprep.subr.bf16.mxu0 0
    %1480 = vmatpush1.bf16.msra.mxu0 0
    %1481 = vmatprep.subr.bf16.mxu0 0
    %1482 = vmatpush1.bf16.msra.mxu0 0
    %1483 = vmatprep.subr.bf16.mxu0 0
    %1484 = vmatpush1.bf16.msra.mxu0 0
    %1485 = vmatprep.subr.bf16.mxu0 0
    %1486 = vmatpush1.bf16.msra.mxu0 0
    %1487 = vmatprep.subr.bf16.mxu0 0
    %1488 = vmatpush1.bf16.msra.mxu0 0
    %1489 = vmatprep.subr.bf16.mxu0 0
    %1490 = vmatpush1.bf16.msra.mxu0 0
    %1491 = vmatprep.subr.bf16.mxu0 0
    %1492 = vmatpush1.bf16.msra.mxu0 0
    %1493 = vmatprep.mubr.bf16.mxu0 0
    %1494 = vmatmul.mubr.bf16.gmra.mrb[0].mxu0 %v1459
    %v1495 = vpop.f32.mrb[0].mxu0
    %v1496 = vadd.f32 0.0, %v1495
    %v1497 = vpop.f32.mrb[0].mxu0
    %v1498 = vadd.f32 0.0, %v1497
    %v1499 = vpop.f32.mrb[0].mxu0
    %v1500 = vpop.f32.mrb[0].mxu0
    %1501 = vdwg.mxu0
    %v1502 = vadd.f32 %v67, %v1496
    %v1503 = vadd.f32 %v71, %v1498
    %v1504 = vxor.u32 %v1502, 2147483648
    %v1505 = vxor.u32 %v1503, 2147483648
    %v1506 = vmul.f32 %v1504, 1.442695
    %v1507 = vpow.pop %v1506
    %v1508 = vmul.f32 %v1505, 1.442695
    %v1509 = vpow.pop %v1508
    %v1510 = vadd.f32 %v1507, 1.0
    %v1511 = vadd.f32 %v1509, 1.0
    %v1512 = vrcp.pop %v1510
    %v1513 = vmul.f32 1.0, %v1512
    %v1514 = vrcp.pop %v1511
    %v1515 = vmul.f32 1.0, %v1514
    %v1516 = vtanh.pop %v1503
    %v1517 = vmul.f32 %v1513, %v1450
    %1519 = vrot.lane.b32.xlu0 %v1516, 64
    %v1520 = vpop.permute.xlu0 %1519
    %v1522 = vmul.f32 %v1513, %v1520
    %1524 = vrot.lane.b32.xlu0 %v1522, 64
    %v1525 = vpop.permute.xlu0 %1524
    %v1527 = vadd.f32 %v1517, %v1525
    %v1528 = vtanh.pop %v1527
    %1530 = vrot.lane.b32.xlu0 %v1528, 64
    %v1531 = vpop.permute.xlu0 %1530
    %v1533 = vmul.f32 %v1515, %v1531
    %v1534 = vpack.c.bf16 %v1533, %v1533
    %v1535 = vld [vmem:[%s4] sm:$0xf]
    %v1536 = vld [vmem:[%s4 + $0x4] sm:$0xf]
    %v1537 = vld [vmem:[%s4 + $0x8] sm:$0xf]
    %v1538 = vld [vmem:[%s4 + $0xc] sm:$0xf]
    %v1539 = vld [vmem:[%s4 + $0x10] sm:$0xf]
    %v1540 = vld [vmem:[%s4 + $0x14] sm:$0xf]
    %v1541 = vld [vmem:[%s4 + $0x18] sm:$0xf]
    %v1542 = vld [vmem:[%s4 + $0x1c] sm:$0xf]
    %v1543 = vld [vmem:[%s5] sm:$0x1]
    %v1545 = vlaneseq
    %v1546 = vshrl.u32 %v1545, 7
    %v1547 = vsub.s32 0, %v1546
    %v1548 = vrot.slane %v1543, %v1547
    %v1558 = vunpack.c.l.b16 %v1535
    %v1559 = vunpack.c.l.b16 %v1536
    %v1560 = vunpack.c.l.b16 %v1537
    %v1561 = vunpack.c.l.b16 %v1538
    %v1562 = vunpack.c.l.b16 %v1539
    %v1563 = vunpack.c.l.b16 %v1540
    %v1564 = vunpack.c.l.b16 %v1541
    %v1565 = vunpack.c.l.b16 %v1542
    %v1566 = vpack.c.b16 %v1559, %v1558
    %v1567 = vpack.c.b16 %v1561, %v1560
    %v1568 = vpack.c.b16 %v1563, %v1562
    %v1569 = vpack.c.b16 %v1565, %v1564
    %v1575 = vsel %vm360, %v1534, 0
    %1577 = vmatprep.subr.bf16.mxu0 0
    %1578 = vmatpush1.bf16.msra.mxu0 %v1566
    %1579 = vmatprep.subr.bf16.mxu0 0
    %1580 = vmatpush1.bf16.msra.mxu0 %v1567
    %1581 = vmatprep.subr.bf16.mxu0 0
    %1582 = vmatpush1.bf16.msra.mxu0 %v1568
    %1583 = vmatprep.subr.bf16.mxu0 0
    %1584 = vmatpush1.bf16.msra.mxu0 %v1569
    %1585 = vmatprep.subr.bf16.mxu0 0
    %1586 = vmatpush1.bf16.msra.mxu0 0
    %1587 = vmatprep.subr.bf16.mxu0 0
    %1588 = vmatpush1.bf16.msra.mxu0 0
    %1589 = vmatprep.subr.bf16.mxu0 0
    %1590 = vmatpush1.bf16.msra.mxu0 0
    %1591 = vmatprep.subr.bf16.mxu0 0
    %1592 = vmatpush1.bf16.msra.mxu0 0
    %1593 = vmatprep.subr.bf16.mxu0 0
    %1594 = vmatpush1.bf16.msra.mxu0 0
    %1595 = vmatprep.subr.bf16.mxu0 0
    %1596 = vmatpush1.bf16.msra.mxu0 0
    %1597 = vmatprep.subr.bf16.mxu0 0
    %1598 = vmatpush1.bf16.msra.mxu0 0
    %1599 = vmatprep.subr.bf16.mxu0 0
    %1600 = vmatpush1.bf16.msra.mxu0 0
    %1601 = vmatprep.subr.bf16.mxu0 0
    %1602 = vmatpush1.bf16.msra.mxu0 0
    %1603 = vmatprep.subr.bf16.mxu0 0
    %1604 = vmatpush1.bf16.msra.mxu0 0
    %1605 = vmatprep.subr.bf16.mxu0 0
    %1606 = vmatpush1.bf16.msra.mxu0 0
    %1607 = vmatprep.subr.bf16.mxu0 0
    %1608 = vmatpush1.bf16.msra.mxu0 0
    %1609 = vmatprep.mubr.bf16.mxu0 0
    %1610 = vmatmul.mubr.bf16.gmra.mrb[0].mxu0 %v1575
    %v1611 = vpop.f32.mrb[0].mxu0
    %v1612 = vadd.f32 %v1548, %v1611
    %v1613 = vpop.f32.mrb[0].mxu0
    %v1614 = vpop.f32.mrb[0].mxu0
    %v1615 = vpop.f32.mrb[0].mxu0
    %1616 = vdwg.mxu0
    %vm1617 = vcmask 31744
    %1618 = vst.msk [vmem:[%s6] sm:$0xff] %vm1617, %v1612
    // Predicated region
    $region34: #{lstm_predictor.1} parent=1 // pred_check
      _
    $region35: #{lstm_predictor.1} parent=1 // pred_check_branch
      %1620 = sbr.rel (0) target = $region37
    $region36: #{lstm_predictor.1} parent=1 // pred_region
      _
    $region37: #{lstm_predictor.1} parent=1 // pred_fallthru
      _
    // Predicated region
    $region38: #{lstm_predictor.1} parent=1 // pred_check
      _
    $region39: #{lstm_predictor.1} parent=1 // pred_check_branch
      %1622 = sbr.rel (0) target = $region41
    $region40: #{lstm_predictor.1} parent=1 // pred_region
      _
    $region41: #{lstm_predictor.1} parent=1 // pred_fallthru
      _
    %1623 = vsyncpa [#allocation3], 1
    %1624 = vsyncpa [#allocation5], 1

</llo_original>
